<compile_context>
chip_gen: v7x
topology: tpu7x:2x2x1
jax: 0.10.0
libtpu: 0.0.40
codegen_flags: <defaults>
</compile_context>

<pallas_src>
import jax
import jax.numpy as jnp
from jax.experimental import pallas as pl
from jax.experimental.pallas import tpu as pltpu


# ---------------------------------------------------------------------------
# Kernel
# ---------------------------------------------------------------------------
def _selector_kernel(q_ref, h_ref,
                     wq_ref, bq_ref, wk_ref, bk_ref, wv_ref, bv_ref,
                     wo_ref, bo_ref, sum_sel_ref, bcast_sel_ref,
                     logits_t_ref, attended_ref):
    """One grid step == one tile of `block_b` batch rows.

    q_ref: [Bt, D] (compute dtype), h_ref: [Bt, N, D] (compute dtype),
    weights in compute dtype, biases / selectors in f32.
    Outputs: logits_t_ref [1, N, Bt] (lane-dense slab), attended_ref [Bt, D].
    """
    Bt, D = q_ref.shape
    N = h_ref.shape[1]

    h = h_ref[...]                                     # [Bt, N, D], native compute dtype
    h_flat = h.reshape(Bt * N, D)

    # ---- full-width projections: single MXU passes, f32 accumulation ----
    # 1/sqrt(head_dim) is already folded into wq/bq by the wrapper.
    Q = jnp.dot(q_ref[...], wq_ref[...],
                preferred_element_type=jnp.float32) + bq_ref[...]            # [Bt, D]
    K = (jnp.dot(h_flat, wk_ref[...], preferred_element_type=jnp.float32)
         + bk_ref[...]).reshape(Bt, N, D)                                    # [Bt, N, D]
    V = (jnp.dot(h_flat, wv_ref[...], preferred_element_type=jnp.float32)
         + bv_ref[...]).reshape(Bt, N, D)                                    # [Bt, N, D]

    # ---- per-head scaled dot-product attention (query length == 1) ------
    # sum_sel [D, H] collapses each head's hd lanes; bcast_sel [H, D] broadcasts a
    # head value back to its lanes.  Both are tiny f32 matmuls next to the
    # projections, so they stay exact.  (If the bundle showed the MXU slot binding
    # they could be replaced by an XLU roll-based segmented reduce.)
    qk = Q[:, None, :] * K                                                   # [Bt, N, D] f32 VPU
    scores = jnp.dot(qk.reshape(Bt * N, D), sum_sel_ref[...],
                     preferred_element_type=jnp.float32)                     # [Bt*N, H]
    H_heads = scores.shape[-1]
    scores = scores.reshape(Bt, N, H_heads)

    m = jnp.max(scores, axis=1, keepdims=True)                               # [Bt, 1, H]
    p = jnp.exp(scores - m)
    p = p * pl.reciprocal(jnp.sum(p, axis=1, keepdims=True), approx=True)    # softmax over N

    p_full = jnp.dot(p.reshape(Bt * N, H_heads), bcast_sel_ref[...],
                     preferred_element_type=jnp.float32).reshape(Bt, N, D)   # [Bt, N, D]
    ctx = jnp.sum(p_full * V, axis=1)                                        # [Bt, D]

    attended = jnp.dot(ctx.astype(wo_ref.dtype), wo_ref[...],
                       preferred_element_type=jnp.float32) + bo_ref[...]     # [Bt, D]

    # AttentionPooling over a length-1 sequence: weights are identically 1, so
    # pooled == attended.  Selection logits = <attended, hyp_n> over D (lane reduce).
    logits = jnp.sum(attended[:, None, :] * h.astype(jnp.float32), axis=-1)  # [Bt, N]

    # Lane-dense store: Bt on the lane axis of the output slab.
    logits_t_ref[...] = logits.T[None].astype(logits_t_ref.dtype)            # [1, N, Bt]
    attended_ref[...] = attended.astype(attended_ref.dtype)                  # [Bt, D]


# ---------------------------------------------------------------------------
# Wrapper
# ---------------------------------------------------------------------------
def _round_up(x, m):
    return ((x + m - 1) // m) * m


def _vmem_capacity_bytes():
    try:
        cap = getattr(pltpu.get_tpu_info(), "vmem_capacity_bytes", None)
        if cap:
            return int(cap)
    except Exception:
        pass
    return 64 << 20  # conservative fallback (v7x-sized)


def _auto_block_b(B, N, D, act_bytes, vmem_limit, target=256):
    """Batch-tile size: fill the MXU M-dim (~`target` rows) subject to a VMEM
    budget (double-buffered weights + hypotheses tile + the ~4 live f32
    [Bt, N, D] intermediates), and keep >= 2 tiles when B permits so the
    'parallel' grid axis feeds both v7x TensorCores."""
    d_pad = _round_up(D, 128)
    weight_bytes = 2 * 4 * D * d_pad * act_bytes           # 4 projections, double-buffered
    budget = max(vmem_limit - weight_bytes - (4 << 20), vmem_limit // 8)
    row_bytes = N * d_pad * (2 * act_bytes + 4 * 4)         # hyp tile (x2 buf) + f32 temps
    cap = max(8, (budget // max(row_bytes, 1)) // 8 * 8)
    bb = min(target, cap)
    if B > 8:
        bb = min(bb, _round_up(pl.cdiv(B, 2), 8))           # >= 2 tiles for megacore
    return int(max(8, min(bb, _round_up(B, 8))))


def hypothesis_selector(query, hypotheses, params, *, n_heads: int,
                        block_b: int | None = None,
                        compute_dtype=jnp.bfloat16):
    """query: [B, 1, D], hypotheses: [B, N, D]. Returns dict like the PyTorch module.

    compute_dtype is used for the MXU operands (activations + weights); all
    accumulation and softmax math stays f32.  bf16 is recommended on all of
    v5e/v6e/v7x (the MXU is bf16-native everywhere)."""
    B, one, D = query.shape
    assert one == 1, "query must have seq length 1"
    N = hypotheses.shape[1]
    assert D % n_heads == 0
    hd = D // n_heads
    scale = 1.0 / (hd ** 0.5)

    # wp/bp (AttentionPooling weights) are unused: softmax over a length-1
    # sequence is identically 1, so the pooling is the identity map (exact).
    wq, bq, wk, bk, wv, bv, wo, bo, wp, bp = params

    # ---- param prep (runs once, outside the kernel) ----
    wq_c = (wq * scale).astype(compute_dtype)               # fold 1/sqrt(hd) into Wq/bq
    bq_f = (bq * scale).astype(jnp.float32).reshape(1, D)
    wk_c = wk.astype(compute_dtype)
    bk_f = bk.astype(jnp.float32).reshape(1, D)
    wv_c = wv.astype(compute_dtype)
    bv_f = bv.astype(jnp.float32).reshape(1, D)
    wo_c = wo.astype(compute_dtype)
    bo_f = bo.astype(jnp.float32).reshape(1, D)

    # Per-head selector matrices, built once here (JAX doesn't CSE broadcast_in_dim).
    head_of_lane = jnp.arange(D, dtype=jnp.int32) // hd
    heads = jnp.arange(n_heads, dtype=jnp.int32)
    sum_sel = (head_of_lane[:, None] == heads[None, :]).astype(jnp.float32)   # [D, H]
    bcast_sel = sum_sel.T                                                      # [H, D]

    # Dense activations at the kernel boundary; casting here halves streamed bytes.
    q2 = query[:, 0, :].astype(compute_dtype)                # [B, D]
    hyp = hypotheses.astype(compute_dtype)                   # [B, N, D]

    act_bytes = jnp.dtype(compute_dtype).itemsize
    vmem_cap = _vmem_capacity_bytes()
    vmem_limit = int(min(vmem_cap * 3 // 4, 100 << 20))      # above 16/32 MiB scoped defaults

    if block_b is None:
        block_b = _auto_block_b(B, N, D, act_bytes, vmem_limit)
    block_b = _round_up(max(8, min(block_b, _round_up(B, 8))), 8)
    n_tiles = pl.cdiv(B, block_b)
    B_pad = n_tiles * block_b
    if B_pad != B:
        pad = B_pad - B
        q2 = jnp.pad(q2, ((0, pad), (0, 0)))
        hyp = jnp.pad(hyp, ((0, pad), (0, 0), (0, 0)))

    def weight_spec(shape):
        return pl.BlockSpec(shape, lambda b: (0,) * len(shape))

    logits_slab, attended = pl.pallas_call(
        _selector_kernel,
        out_shape=(
            jax.ShapeDtypeStruct((n_tiles, N, block_b), jnp.float32),   # lane-dense logits
            jax.ShapeDtypeStruct((B_pad, D), jnp.float32),
        ),
        grid_spec=pltpu.PrefetchScalarGridSpec(
            num_scalar_prefetch=0,
            grid=(n_tiles,),
            in_specs=[
                pl.BlockSpec((block_b, D), lambda b: (b, 0)),            # query tile [Bt, D]
                pl.BlockSpec((block_b, N, D), lambda b: (b, 0, 0)),      # hypotheses tile
                weight_spec((D, D)), weight_spec((1, D)),                # Wq*scale, bq*scale
                weight_spec((D, D)), weight_spec((1, D)),                # Wk, bk
                weight_spec((D, D)), weight_spec((1, D)),                # Wv, bv
                weight_spec((D, D)), weight_spec((1, D)),                # Wo, bo
                weight_spec((D, n_heads)), weight_spec((n_heads, D)),    # head selectors
            ],
            out_specs=[
                pl.BlockSpec((1, N, block_b), lambda b: (b, 0, 0)),      # logits slab
                pl.BlockSpec((block_b, D), lambda b: (b, 0)),            # attended
            ],
        ),
        compiler_params=pltpu.CompilerParams(
            dimension_semantics=("parallel",),        # batch tiles shard across v7x TCs
            vmem_limit_bytes=vmem_limit,
        ),
    )(q2, hyp, wq_c, bq_f, wk_c, bk_f, wv_c, bv_f, wo_c, bo_f, sum_sel, bcast_sel)

    # [n_tiles, N, block_b] -> [B, N] ; cheap wrapper-side layout plumbing.
    logits = logits_slab.transpose(0, 2, 1).reshape(B_pad, N)[:B]
    attended = attended[:B, None, :]                          # back to [B, 1, D]
    return {'selection_logits': logits, 'attended_representation': attended}


# ---------------------------------------------------------------------------
# Pure-JAX reference (same forward pass, incl. the degenerate length-1 pooling)
# ---------------------------------------------------------------------------
def _reference(query, hypotheses, params, n_heads):
    wq, bq, wk, bk, wv, bv, wo, bo, wp, bp = params
    B, _, D = query.shape
    N = hypotheses.shape[1]
    hd = D // n_heads
    q = query @ wq + bq
    k = hypotheses @ wk + bk
    v = hypotheses @ wv + bv
    qh = q.reshape(B, 1, n_heads, hd).transpose(0, 2, 1, 3)
    kh = k.reshape(B, N, n_heads, hd).transpose(0, 2, 1, 3)
    vh = v.reshape(B, N, n_heads, hd).transpose(0, 2, 1, 3)
    s = jnp.einsum('bhqd,bhkd->bhqk', qh, kh) / jnp.sqrt(jnp.float32(hd))
    p = jax.nn.softmax(s, axis=-1)
    ctx = jnp.einsum('bhqk,bhkd->bhqd', p, vh).transpose(0, 2, 1, 3).reshape(B, 1, D)
    attended = ctx @ wo + bo
    pool_w = jax.nn.softmax(attended @ wp + bp, axis=1)       # length-1 seq -> all ones
    pooled = jnp.sum(pool_w * attended, axis=1)
    logits = jnp.einsum('bd,bnd->bn', pooled, hypotheses)
    return logits, attended


if __name__ == "__main__":
    B, N, D, H = 16, 8, 32, 8   # batch, n_hypotheses, d_model, n_heads

    key = jax.random.PRNGKey(0)
    ks = jax.random.split(key, 12)

    def w(k, shape):
        return jax.random.normal(k, shape, dtype=jnp.float32) * 0.05

    params = (
        w(ks[0], (D, D)), w(ks[1], (1, D)),   # Wq, bq
        w(ks[2], (D, D)), w(ks[3], (1, D)),   # Wk, bk
        w(ks[4], (D, D)), w(ks[5], (1, D)),   # Wv, bv
        w(ks[6], (D, D)), w(ks[7], (1, D)),   # Wo, bo
        w(ks[8], (D, 1)), w(ks[9], (1, 1)),   # Wpool, bpool (unused: len-1 pooling is identity)
    )

    query = jax.random.normal(ks[10], (B, 1, D), dtype=jnp.float32)
    hypotheses = jax.random.normal(ks[11], (B, N, D), dtype=jnp.float32)

    ref_logits, ref_attended = _reference(query, hypotheses, params, H)

    # f32 compute path: tight check (only the approx EUP reciprocal differs).
    out_f32 = hypothesis_selector(query, hypotheses, params, n_heads=H,
                                  compute_dtype=jnp.float32)
    jax.block_until_ready(out_f32)
    assert jnp.allclose(out_f32['selection_logits'], ref_logits, atol=5e-3, rtol=5e-3)
    assert jnp.allclose(out_f32['attended_representation'], ref_attended, atol=5e-3, rtol=5e-3)

    # Default bf16 MXU-operand path (recommended on v5e/v6e/v7x): looser tolerance.
    out_bf16 = hypothesis_selector(query, hypotheses, params, n_heads=H)
    jax.block_until_ready(out_bf16)
    assert jnp.allclose(out_bf16['selection_logits'], ref_logits, atol=6e-2, rtol=6e-2)
    assert jnp.allclose(out_bf16['attended_representation'], ref_attended, atol=6e-2, rtol=6e-2)

    print("KERNEL_OK")
</pallas_src>

<mosaic_0001>
module attributes {stable_mosaic.version = 11 : i64} {
  func.func @_selector_kernel(%arg0: i32, %arg1: memref<8x32xf32, #tpu.memory_space<vmem>>, %arg2: memref<8x8x32xf32, #tpu.memory_space<vmem>>, %arg3: memref<32x32xf32, #tpu.memory_space<vmem>>, %arg4: memref<1x32xf32, #tpu.memory_space<vmem>>, %arg5: memref<32x32xf32, #tpu.memory_space<vmem>>, %arg6: memref<1x32xf32, #tpu.memory_space<vmem>>, %arg7: memref<32x32xf32, #tpu.memory_space<vmem>>, %arg8: memref<1x32xf32, #tpu.memory_space<vmem>>, %arg9: memref<32x32xf32, #tpu.memory_space<vmem>>, %arg10: memref<1x32xf32, #tpu.memory_space<vmem>>, %arg11: memref<32x8xf32, #tpu.memory_space<vmem>>, %arg12: memref<8x32xf32, #tpu.memory_space<vmem>>, %arg13: memref<1x8x8xf32, #tpu.memory_space<vmem>>, %arg14: memref<8x32xf32, #tpu.memory_space<vmem>>) attributes {dimension_semantics = [#tpu.dimension_semantics<parallel>], iteration_bounds = array<i64: 2>, scalar_prefetch = 0 : i64, scratch_operands = 0 : i64, tpu.core_type = #tpu.core_type<tc>, window_params = [{transform_indices = @transform_0, window_bounds = array<i64: 8, 32>}, {transform_indices = @transform_1, window_bounds = array<i64: 8, 8, 32>}, {pipeline_mode = #tpu.pipeline_mode<synchronous>, transform_indices = @transform_2, window_bounds = array<i64: 32, 32>}, {pipeline_mode = #tpu.pipeline_mode<synchronous>, transform_indices = @transform_3, window_bounds = array<i64: 1, 32>}, {pipeline_mode = #tpu.pipeline_mode<synchronous>, transform_indices = @transform_4, window_bounds = array<i64: 32, 32>}, {pipeline_mode = #tpu.pipeline_mode<synchronous>, transform_indices = @transform_5, window_bounds = array<i64: 1, 32>}, {pipeline_mode = #tpu.pipeline_mode<synchronous>, transform_indices = @transform_6, window_bounds = array<i64: 32, 32>}, {pipeline_mode = #tpu.pipeline_mode<synchronous>, transform_indices = @transform_7, window_bounds = array<i64: 1, 32>}, {pipeline_mode = #tpu.pipeline_mode<synchronous>, transform_indices = @transform_8, window_bounds = array<i64: 32, 32>}, {pipeline_mode = #tpu.pipeline_mode<synchronous>, transform_indices = @transform_9, window_bounds = array<i64: 1, 32>}, {pipeline_mode = #tpu.pipeline_mode<synchronous>, transform_indices = @transform_10, window_bounds = array<i64: 32, 8>}, {pipeline_mode = #tpu.pipeline_mode<synchronous>, transform_indices = @transform_11, window_bounds = array<i64: 8, 32>}, {transform_indices = @transform_12, window_bounds = array<i64: 1, 8, 8>}, {transform_indices = @transform_13, window_bounds = array<i64: 8, 32>}]} {
    %c0 = arith.constant 0 : index
    %c0_0 = arith.constant 0 : index
    %c0_1 = arith.constant 0 : index
    %0 = vector.load %arg2[%c0, %c0_0, %c0_1] : memref<8x8x32xf32, #tpu.memory_space<vmem>>, vector<8x8x32xf32>
    %1 = vector.shape_cast %0 : vector<8x8x32xf32> to vector<64x32xf32>
    %c0_2 = arith.constant 0 : index
    %c0_3 = arith.constant 0 : index
    %2 = vector.load %arg1[%c0_2, %c0_3] : memref<8x32xf32, #tpu.memory_space<vmem>>, vector<8x32xf32>
    %c0_4 = arith.constant 0 : index
    %c0_5 = arith.constant 0 : index
    %3 = vector.load %arg3[%c0_4, %c0_5] : memref<32x32xf32, #tpu.memory_space<vmem>>, vector<32x32xf32>
    %cst = arith.constant dense<0.000000e+00> : vector<8x32xf32>
    %4 = tpu.matmul %2, %3, %cst {dimension_numbers = #tpu.dot_dimension_numbers<[1], [0], [0], [1], [0, 0, 1, 1], [], []>} : vector<8x32xf32>, vector<32x32xf32>, vector<8x32xf32> -> vector<8x32xf32>
    %c0_6 = arith.constant 0 : index
    %c0_7 = arith.constant 0 : index
    %5 = vector.load %arg4[%c0_6, %c0_7] : memref<1x32xf32, #tpu.memory_space<vmem>>, vector<1x32xf32>
    %6 = vector.broadcast %5 : vector<1x32xf32> to vector<8x32xf32>
    %7 = arith.addf %4, %6 : vector<8x32xf32>
    %c0_8 = arith.constant 0 : index
    %c0_9 = arith.constant 0 : index
    %8 = vector.load %arg5[%c0_8, %c0_9] : memref<32x32xf32, #tpu.memory_space<vmem>>, vector<32x32xf32>
    %cst_10 = arith.constant dense<0.000000e+00> : vector<64x32xf32>
    %9 = tpu.matmul %1, %8, %cst_10 {dimension_numbers = #tpu.dot_dimension_numbers<[1], [0], [0], [1], [0, 0, 1, 1], [], []>} : vector<64x32xf32>, vector<32x32xf32>, vector<64x32xf32> -> vector<64x32xf32>
    %c0_11 = arith.constant 0 : index
    %c0_12 = arith.constant 0 : index
    %10 = vector.load %arg6[%c0_11, %c0_12] : memref<1x32xf32, #tpu.memory_space<vmem>>, vector<1x32xf32>
    %11 = vector.broadcast %10 : vector<1x32xf32> to vector<64x32xf32>
    %12 = arith.addf %9, %11 : vector<64x32xf32>
    %13 = vector.shape_cast %12 : vector<64x32xf32> to vector<8x8x32xf32>
    %c0_13 = arith.constant 0 : index
    %c0_14 = arith.constant 0 : index
    %14 = vector.load %arg7[%c0_13, %c0_14] : memref<32x32xf32, #tpu.memory_space<vmem>>, vector<32x32xf32>
    %cst_15 = arith.constant dense<0.000000e+00> : vector<64x32xf32>
    %15 = tpu.matmul %1, %14, %cst_15 {dimension_numbers = #tpu.dot_dimension_numbers<[1], [0], [0], [1], [0, 0, 1, 1], [], []>} : vector<64x32xf32>, vector<32x32xf32>, vector<64x32xf32> -> vector<64x32xf32>
    %c0_16 = arith.constant 0 : index
    %c0_17 = arith.constant 0 : index
    %16 = vector.load %arg8[%c0_16, %c0_17] : memref<1x32xf32, #tpu.memory_space<vmem>>, vector<1x32xf32>
    %17 = vector.broadcast %16 : vector<1x32xf32> to vector<64x32xf32>
    %18 = arith.addf %15, %17 : vector<64x32xf32>
    %19 = vector.shape_cast %18 : vector<64x32xf32> to vector<8x8x32xf32>
    %20 = vector.shape_cast %7 : vector<8x32xf32> to vector<8x1x32xf32>
    %21 = vector.broadcast %20 : vector<8x1x32xf32> to vector<8x8x32xf32>
    %22 = arith.mulf %21, %13 : vector<8x8x32xf32>
    %23 = vector.shape_cast %22 : vector<8x8x32xf32> to vector<64x32xf32>
    %c0_18 = arith.constant 0 : index
    %c0_19 = arith.constant 0 : index
    %24 = vector.load %arg11[%c0_18, %c0_19] : memref<32x8xf32, #tpu.memory_space<vmem>>, vector<32x8xf32>
    %cst_20 = arith.constant dense<0.000000e+00> : vector<64x8xf32>
    %25 = tpu.matmul %23, %24, %cst_20 {dimension_numbers = #tpu.dot_dimension_numbers<[1], [0], [0], [1], [0, 0, 1, 1], [], []>} : vector<64x32xf32>, vector<32x8xf32>, vector<64x8xf32> -> vector<64x8xf32>
    %26 = vector.shape_cast %25 : vector<64x8xf32> to vector<8x8x8xf32>
    %cst_21 = arith.constant dense<0xFF800000> : vector<8x8xf32>
    %27 = vector.multi_reduction <maximumf>, %26, %cst_21 [1] : vector<8x8x8xf32> to vector<8x8xf32>
    %28 = vector.shape_cast %27 : vector<8x8xf32> to vector<8x1x8xf32>
    %29 = vector.broadcast %28 : vector<8x1x8xf32> to vector<8x8x8xf32>
    %30 = arith.subf %26, %29 : vector<8x8x8xf32>
    %31 = math.exp %30 : vector<8x8x8xf32>
    %cst_22 = arith.constant dense<0.000000e+00> : vector<8x8xf32>
    %32 = vector.multi_reduction <add>, %31, %cst_22 [1] : vector<8x8x8xf32> to vector<8x8xf32>
    %33 = vector.shape_cast %32 : vector<8x8xf32> to vector<8x1x8xf32>
    %34 = tpu.reciprocal %33 {approx = true} : vector<8x1x8xf32> -> vector<8x1x8xf32>
    %35 = vector.broadcast %34 : vector<8x1x8xf32> to vector<8x8x8xf32>
    %36 = arith.mulf %31, %35 : vector<8x8x8xf32>
    %37 = vector.shape_cast %36 : vector<8x8x8xf32> to vector<64x8xf32>
    %c0_23 = arith.constant 0 : index
    %c0_24 = arith.constant 0 : index
    %38 = vector.load %arg12[%c0_23, %c0_24] : memref<8x32xf32, #tpu.memory_space<vmem>>, vector<8x32xf32>
    %cst_25 = arith.constant dense<0.000000e+00> : vector<64x32xf32>
    %39 = tpu.matmul %37, %38, %cst_25 {dimension_numbers = #tpu.dot_dimension_numbers<[1], [0], [0], [1], [0, 0, 1, 1], [], []>} : vector<64x8xf32>, vector<8x32xf32>, vector<64x32xf32> -> vector<64x32xf32>
    %40 = vector.shape_cast %39 : vector<64x32xf32> to vector<8x8x32xf32>
    %41 = arith.mulf %40, %19 : vector<8x8x32xf32>
    %cst_26 = arith.constant dense<0.000000e+00> : vector<8x32xf32>
    %42 = vector.multi_reduction <add>, %41, %cst_26 [1] : vector<8x8x32xf32> to vector<8x32xf32>
    %c0_27 = arith.constant 0 : index
    %c0_28 = arith.constant 0 : index
    %43 = vector.load %arg9[%c0_27, %c0_28] : memref<32x32xf32, #tpu.memory_space<vmem>>, vector<32x32xf32>
    %cst_29 = arith.constant dense<0.000000e+00> : vector<8x32xf32>
    %44 = tpu.matmul %42, %43, %cst_29 {dimension_numbers = #tpu.dot_dimension_numbers<[1], [0], [0], [1], [0, 0, 1, 1], [], []>} : vector<8x32xf32>, vector<32x32xf32>, vector<8x32xf32> -> vector<8x32xf32>
    %c0_30 = arith.constant 0 : index
    %c0_31 = arith.constant 0 : index
    %45 = vector.load %arg10[%c0_30, %c0_31] : memref<1x32xf32, #tpu.memory_space<vmem>>, vector<1x32xf32>
    %46 = vector.broadcast %45 : vector<1x32xf32> to vector<8x32xf32>
    %47 = arith.addf %44, %46 : vector<8x32xf32>
    %48 = vector.shape_cast %47 : vector<8x32xf32> to vector<8x1x32xf32>
    %49 = vector.broadcast %48 : vector<8x1x32xf32> to vector<8x8x32xf32>
    %50 = arith.mulf %49, %0 : vector<8x8x32xf32>
    %cst_32 = arith.constant dense<0.000000e+00> : vector<8x8xf32>
    %51 = vector.multi_reduction <add>, %50, %cst_32 [2] : vector<8x8x32xf32> to vector<8x8xf32>
    %52 = tpu.transpose %51, [1, 0] : vector<8x8xf32> -> vector<8x8xf32>
    %53 = vector.shape_cast %52 : vector<8x8xf32> to vector<1x8x8xf32>
    %c0_33 = arith.constant 0 : index
    %c0_34 = arith.constant 0 : index
    %c0_35 = arith.constant 0 : index
    %54 = vector.load %arg13[%c0_33, %c0_34, %c0_35] : memref<1x8x8xf32, #tpu.memory_space<vmem>>, vector<1x8x8xf32>
    tpu.vector_store %arg13[%c0_33, %c0_34, %c0_35], %53 {strides = array<i32>} : memref<1x8x8xf32, #tpu.memory_space<vmem>>, vector<1x8x8xf32>,
    %c0_36 = arith.constant 0 : index
    %c0_37 = arith.constant 0 : index
    %55 = vector.load %arg14[%c0_36, %c0_37] : memref<8x32xf32, #tpu.memory_space<vmem>>, vector<8x32xf32>
    tpu.vector_store %arg14[%c0_36, %c0_37], %47 {strides = array<i32>} : memref<8x32xf32, #tpu.memory_space<vmem>>, vector<8x32xf32>,
    return
  }
  func.func @transform_0(%arg0: i32) -> (i32, i32) {
    %c0_i32 = arith.constant 0 : i32
    %c0_i32_0 = arith.constant 0 : i32
    return %arg0, %c0_i32 : i32, i32
  }
  func.func @transform_1(%arg0: i32) -> (i32, i32, i32) {
    %c0_i32 = arith.constant 0 : i32
    %c0_i32_0 = arith.constant 0 : i32
    %c0_i32_1 = arith.constant 0 : i32
    return %arg0, %c0_i32, %c0_i32_0 : i32, i32, i32
  }
  func.func @transform_2(%arg0: i32) -> (i32, i32) {
    %c0_i32 = arith.constant 0 : i32
    %c0_i32_0 = arith.constant 0 : i32
    %c0_i32_1 = arith.constant 0 : i32
    return %c0_i32, %c0_i32_0 : i32, i32
  }
  func.func @transform_3(%arg0: i32) -> (i32, i32) {
    %c0_i32 = arith.constant 0 : i32
    %c0_i32_0 = arith.constant 0 : i32
    %c0_i32_1 = arith.constant 0 : i32
    return %c0_i32, %c0_i32_0 : i32, i32
  }
  func.func @transform_4(%arg0: i32) -> (i32, i32) {
    %c0_i32 = arith.constant 0 : i32
    %c0_i32_0 = arith.constant 0 : i32
    %c0_i32_1 = arith.constant 0 : i32
    return %c0_i32, %c0_i32_0 : i32, i32
  }
  func.func @transform_5(%arg0: i32) -> (i32, i32) {
    %c0_i32 = arith.constant 0 : i32
    %c0_i32_0 = arith.constant 0 : i32
    %c0_i32_1 = arith.constant 0 : i32
    return %c0_i32, %c0_i32_0 : i32, i32
  }
  func.func @transform_6(%arg0: i32) -> (i32, i32) {
    %c0_i32 = arith.constant 0 : i32
    %c0_i32_0 = arith.constant 0 : i32
    %c0_i32_1 = arith.constant 0 : i32
    return %c0_i32, %c0_i32_0 : i32, i32
  }
  func.func @transform_7(%arg0: i32) -> (i32, i32) {
    %c0_i32 = arith.constant 0 : i32
    %c0_i32_0 = arith.constant 0 : i32
    %c0_i32_1 = arith.constant 0 : i32
    return %c0_i32, %c0_i32_0 : i32, i32
  }
  func.func @transform_8(%arg0: i32) -> (i32, i32) {
    %c0_i32 = arith.constant 0 : i32
    %c0_i32_0 = arith.constant 0 : i32
    %c0_i32_1 = arith.constant 0 : i32
    return %c0_i32, %c0_i32_0 : i32, i32
  }
  func.func @transform_9(%arg0: i32) -> (i32, i32) {
    %c0_i32 = arith.constant 0 : i32
    %c0_i32_0 = arith.constant 0 : i32
    %c0_i32_1 = arith.constant 0 : i32
    return %c0_i32, %c0_i32_0 : i32, i32
  }
  func.func @transform_10(%arg0: i32) -> (i32, i32) {
    %c0_i32 = arith.constant 0 : i32
    %c0_i32_0 = arith.constant 0 : i32
    %c0_i32_1 = arith.constant 0 : i32
    return %c0_i32, %c0_i32_0 : i32, i32
  }
  func.func @transform_11(%arg0: i32) -> (i32, i32) {
    %c0_i32 = arith.constant 0 : i32
    %c0_i32_0 = arith.constant 0 : i32
    %c0_i32_1 = arith.constant 0 : i32
    return %c0_i32, %c0_i32_0 : i32, i32
  }
  func.func @transform_12(%arg0: i32) -> (i32, i32, i32) {
    %c0_i32 = arith.constant 0 : i32
    %c0_i32_0 = arith.constant 0 : i32
    %c0_i32_1 = arith.constant 0 : i32
    return %arg0, %c0_i32, %c0_i32_0 : i32, i32, i32
  }
  func.func @transform_13(%arg0: i32) -> (i32, i32) {
    %c0_i32 = arith.constant 0 : i32
    %c0_i32_0 = arith.constant 0 : i32
    return %arg0, %c0_i32 : i32, i32
  }
}

</mosaic_0001>

<llo_original>
// kernel: tpu_custom_call.1
$region0: #{tpu_custom_call.1}
  #allocation0 [shape = 'u32[]', space=smem, size = 0x4, offset = 0x4, fixed_abs, tag = 'smem constant byte address 0x4 - core index']
  #allocation1 [shape = 'u32[144,128]{1,0:T(1,128)}', space=vmem, size = 0x12000, scoped, tag = 'internal scratch']
  %s0 = inlined_call_operand.hbm [shape: f32[16,32], index: 0, kind: input, shape index: {}]
  %s1 = inlined_call_operand.hbm [shape: f32[16,8,32], index: 1, kind: input, shape index: {}]
  %s2 = inlined_call_operand.vmem [shape: f32[32,32], index: 2, kind: input, shape index: {}]
  %s3 = inlined_call_operand.vmem [shape: f32[1,32], index: 3, kind: input, shape index: {}]
  %s4 = inlined_call_operand.hbm [shape: f32[32,32], index: 4, kind: input, shape index: {}]
  %s5 = inlined_call_operand.hbm [shape: f32[1,32], index: 5, kind: input, shape index: {}]
  %s6 = inlined_call_operand.hbm [shape: f32[32,32], index: 6, kind: input, shape index: {}]
  %s7 = inlined_call_operand.hbm [shape: f32[1,32], index: 7, kind: input, shape index: {}]
  %s8 = inlined_call_operand.vmem [shape: f32[32,32], index: 8, kind: input, shape index: {}]
  %s9 = inlined_call_operand.hbm [shape: f32[1,32], index: 9, kind: input, shape index: {}]
  %s10 = inlined_call_operand.vmem [shape: f32[32,8], index: 10, kind: input, shape index: {}]
  %s11 = inlined_call_operand.vmem [shape: f32[8,32], index: 11, kind: input, shape index: {}]
  %s12 = inlined_call_operand.hbm [shape: f32[2,8,8], index: 12, kind: output, shape index: {0}]
  %s13 = inlined_call_operand.hbm [shape: f32[16,32], index: 13, kind: output, shape index: {1}]
  %14 = xla_tuple %s12, %s13
  %s15 = sld [smem:[#allocation0]]
  $region117: #{tpu_custom_call.1} parent=0
    _
  %s17 = ssub.s32 1, %s15
  %s18 = scalar_select 0, %s17, %s15
  $region1: #{tpu_custom_call.1} parent=0
    #allocation2 [shape = 'u8[8192]{0}', space=vmem, size = 0x2000, scoped, tag = 'input window, operand 0']
    #allocation3 [shape = 's32[2]{0}', space=sflag, size = 0x8, scoped, tag = 'scoped memory for tpu_custom_call.1']
    #allocation4 [shape = 's32[2]{0}', space=sflag, size = 0x8, scoped, tag = 'scoped memory for tpu_custom_call.1']
    #allocation5 [shape = 'u8[65536]{0}', space=vmem, size = 0x10000, scoped, tag = 'input window, operand 1']
    #allocation6 [shape = 's32[2]{0}', space=sflag, size = 0x8, scoped, tag = 'scoped memory for tpu_custom_call.1']
    #allocation7 [shape = 'u8[16384]{0}', space=vmem, size = 0x4000, scoped, tag = 'input window, operand 4, single buffered']
    #allocation8 [shape = 'u8[512]{0}', space=vmem, size = 0x400, scoped, tag = 'input window, operand 5, single buffered']
    #allocation9 [shape = 's32[1]{0}', space=sflag, size = 0x4, scoped, tag = 'scoped memory for tpu_custom_call.1']
    #allocation10 [shape = 'u8[16384]{0}', space=vmem, size = 0x4000, scoped, tag = 'input window, operand 6, single buffered']
    #allocation11 [shape = 'u8[512]{0}', space=vmem, size = 0x400, scoped, tag = 'input window, operand 7, single buffered']
    #allocation12 [shape = 's32[1]{0}', space=sflag, size = 0x4, scoped, tag = 'scoped memory for tpu_custom_call.1']
    #allocation13 [shape = 'u8[512]{0}', space=vmem, size = 0x400, scoped, tag = 'input window, operand 9, single buffered']
    #allocation14 [shape = 'u8[8192]{0}', space=vmem, size = 0x2000, scoped, tag = 'output window, operand 0']
    #allocation15 [shape = 'u8[8192]{0}', space=vmem, size = 0x2000, scoped, tag = 'output window, operand 1']
    #allocation16 [shape = 's32[2]{0}', space=sflag, size = 0x8, scoped, tag = 'scoped memory for tpu_custom_call.1']
    %19 = vsyncpa [#allocation3], 0
    %s20 = scalar_lea.sflag [#allocation3], 1
    %21 = vsyncpa %s20, 0
    %22 = vsyncpa [#allocation6], 0
    %s23 = scalar_lea.sflag [#allocation6], 1
    %24 = vsyncpa %s23, 0
    %25 = vsyncpa [#allocation9], 0
    %26 = vsyncpa [#allocation12], 0
    %27 = vsyncpa [#allocation4], 0
    %s28 = scalar_lea.sflag [#allocation4], 1
    %29 = vsyncpa %s28, 0
    %30 = vsyncpa [#allocation16], 0
    %s31 = scalar_lea.sflag [#allocation16], 1
    %32 = vsyncpa %s31, 0
    loop: start=0, step=1, limit=4
    $region2: #{tpu_custom_call.1} parent=1 // loop_pre_header
      _
    $region3: #{tpu_custom_call.1} parent=1 // loop_header
      %s34 = sphi 0, %s38
      %p35 = scmp.ge.s32.totalorder %s34, 4
      %s44 = sphi 0, %s46
      %s47 = sphi 0, %s44
      %s48 = sphi 0, %s47
      %s64 = sphi 0, %s48
      %s70 = sphi 0, %s72
      %s73 = sphi 0, %s70
      %s74 = sphi 0, %s73
      %s90 = sphi 0, %s74
      %s94 = sphi 0, %s94
      %s96 = sphi 0, %s94
      %s97 = sphi 0, %s96
      %s111 = sphi 0, %s97
      %s115 = sphi 0, %s115
      %s117 = sphi 0, %s115
      %s118 = sphi 0, %s117
      %s132 = sphi 0, %s118
      %s136 = sphi 0, %s136
      %s138 = sphi 0, %s136
      %s139 = sphi 0, %s138
      %s153 = sphi 0, %s139
      %s157 = sphi 0, %s157
      %s159 = sphi 0, %s157
      %s160 = sphi 0, %s159
      %s174 = sphi 0, %s160
      %s178 = sphi 0, %s178
      %s180 = sphi 0, %s178
      %s181 = sphi 0, %s180
      %s195 = sphi 0, %s181
      %s199 = sphi 0, %s199
      %s201 = sphi 0, %s199
      %s202 = sphi 0, %s201
      %s216 = sphi 0, %s202
      %s220 = sphi 0, %s220
      %s222 = sphi 0, %s220
      %s223 = sphi 0, %s222
      %s237 = sphi 0, %s223
      %s241 = sphi 0, %s241
      %s243 = sphi 0, %s241
      %s244 = sphi 0, %s243
      %s258 = sphi 0, %s244
      %s262 = sphi 0, %s262
      %s264 = sphi 0, %s262
      %s265 = sphi 0, %s264
      %s279 = sphi 0, %s265
      %s283 = sphi 0, %s283
      %s285 = sphi 0, %s283
      %s286 = sphi 0, %s285
      %s300 = sphi 0, %s286
      %s306 = sphi 0, %s308
      %s309 = sphi 0, %s306
      %s310 = sphi 0, %s309
      %s326 = sphi 0, %s310
      %s332 = sphi 0, %s334
      %s335 = sphi 0, %s332
      %s336 = sphi 0, %s335
      %s352 = sphi 0, %s336
    $region4: #{tpu_custom_call.1} parent=1 // loop_header_branch
      %37 = sbr.rel (%p35) target = $region8
    $region5: #{tpu_custom_call.1} parent=1 // loop_body
      %s39 = ssub.s32 %s34, 1
      %s40 = ssub.s32 %s34, 2
      %s41 = sadd.s32 %s34, 1
      %s42 = ssub.s32 %s34, %s41
      %p43 = scmp.eq.s32.totalorder %s42, 0
      %s45 = sadd.s32 %s44, 1
      %s46 = scalar_select %p43, %s44, %s45
      %p49 = pneg %p43
      %p50 = scmp.eq.s32.totalorder %s34, 1
      %p51 = por %p49, %p50
      %p52 = scmp.ne.s32.totalorder %s44, %s47
      %p53 = scmp.eq.s32.totalorder %s34, 0
      %p54 = por %p52, %p53
      %p55 = scmp.ne.s32.totalorder %s44, %s47
      %p56 = scmp.eq.s32.totalorder %s39, 1
      %p57 = por %p55, %p56
      %p58 = scmp.ne.s32.totalorder %s47, %s48
      %p59 = scmp.eq.s32.totalorder %s39, 0
      %p60 = por %p58, %p59
      %p61 = scmp.ne.s32.totalorder %s47, %s48
      %p62 = scmp.eq.s32.totalorder %s40, 1
      %p63 = por %p61, %p62
      %p65 = scmp.ne.s32.totalorder %s48, %s64
      %p66 = scmp.eq.s32.totalorder %s40, 0
      %p67 = por %p65, %p66
      %s68 = ssub.s32 %s34, %s41
      %p69 = scmp.eq.s32.totalorder %s68, 0
      %s71 = sadd.s32 %s70, 1
      %s72 = scalar_select %p69, %s70, %s71
      %p75 = pneg %p69
      %p76 = scmp.eq.s32.totalorder %s34, 1
      %p77 = por %p75, %p76
      %p78 = scmp.ne.s32.totalorder %s70, %s73
      %p79 = scmp.eq.s32.totalorder %s34, 0
      %p80 = por %p78, %p79
      %p81 = scmp.ne.s32.totalorder %s70, %s73
      %p82 = scmp.eq.s32.totalorder %s39, 1
      %p83 = por %p81, %p82
      %p84 = scmp.ne.s32.totalorder %s73, %s74
      %p85 = scmp.eq.s32.totalorder %s39, 0
      %p86 = por %p84, %p85
      %p87 = scmp.ne.s32.totalorder %s73, %s74
      %p88 = scmp.eq.s32.totalorder %s40, 1
      %p89 = por %p87, %p88
      %p91 = scmp.ne.s32.totalorder %s74, %s90
      %p92 = scmp.eq.s32.totalorder %s40, 0
      %p93 = por %p91, %p92
      %s95 = sadd.s32 %s94, 1
      %p98 = scmp.eq.s32.totalorder %s34, 1
      %p99 = scmp.ne.s32.totalorder %s94, %s96
      %p100 = scmp.eq.s32.totalorder %s34, 0
      %p101 = por %p99, %p100
      %p102 = scmp.ne.s32.totalorder %s94, %s96
      %p103 = scmp.eq.s32.totalorder %s39, 1
      %p104 = por %p102, %p103
      %p105 = scmp.ne.s32.totalorder %s96, %s97
      %p106 = scmp.eq.s32.totalorder %s39, 0
      %p107 = por %p105, %p106
      %p108 = scmp.ne.s32.totalorder %s96, %s97
      %p109 = scmp.eq.s32.totalorder %s40, 1
      %p110 = por %p108, %p109
      %p112 = scmp.ne.s32.totalorder %s97, %s111
      %p113 = scmp.eq.s32.totalorder %s40, 0
      %p114 = por %p112, %p113
      %s116 = sadd.s32 %s115, 1
      %p119 = scmp.eq.s32.totalorder %s34, 1
      %p120 = scmp.ne.s32.totalorder %s115, %s117
      %p121 = scmp.eq.s32.totalorder %s34, 0
      %p122 = por %p120, %p121
      %p123 = scmp.ne.s32.totalorder %s115, %s117
      %p124 = scmp.eq.s32.totalorder %s39, 1
      %p125 = por %p123, %p124
      %p126 = scmp.ne.s32.totalorder %s117, %s118
      %p127 = scmp.eq.s32.totalorder %s39, 0
      %p128 = por %p126, %p127
      %p129 = scmp.ne.s32.totalorder %s117, %s118
      %p130 = scmp.eq.s32.totalorder %s40, 1
      %p131 = por %p129, %p130
      %p133 = scmp.ne.s32.totalorder %s118, %s132
      %p134 = scmp.eq.s32.totalorder %s40, 0
      %p135 = por %p133, %p134
      %s137 = sadd.s32 %s136, 1
      %p140 = scmp.eq.s32.totalorder %s34, 1
      %p141 = scmp.ne.s32.totalorder %s136, %s138
      %p142 = scmp.eq.s32.totalorder %s34, 0
      %p143 = por %p141, %p142
      %p144 = scmp.ne.s32.totalorder %s136, %s138
      %p145 = scmp.eq.s32.totalorder %s39, 1
      %p146 = por %p144, %p145
      %p147 = scmp.ne.s32.totalorder %s138, %s139
      %p148 = scmp.eq.s32.totalorder %s39, 0
      %p149 = por %p147, %p148
      %p150 = scmp.ne.s32.totalorder %s138, %s139
      %p151 = scmp.eq.s32.totalorder %s40, 1
      %p152 = por %p150, %p151
      %p154 = scmp.ne.s32.totalorder %s139, %s153
      %p155 = scmp.eq.s32.totalorder %s40, 0
      %p156 = por %p154, %p155
      %s158 = sadd.s32 %s157, 1
      %p161 = scmp.eq.s32.totalorder %s34, 1
      %p162 = scmp.ne.s32.totalorder %s157, %s159
      %p163 = scmp.eq.s32.totalorder %s34, 0
      %p164 = por %p162, %p163
      %p165 = scmp.ne.s32.totalorder %s157, %s159
      %p166 = scmp.eq.s32.totalorder %s39, 1
      %p167 = por %p165, %p166
      %p168 = scmp.ne.s32.totalorder %s159, %s160
      %p169 = scmp.eq.s32.totalorder %s39, 0
      %p170 = por %p168, %p169
      %p171 = scmp.ne.s32.totalorder %s159, %s160
      %p172 = scmp.eq.s32.totalorder %s40, 1
      %p173 = por %p171, %p172
      %p175 = scmp.ne.s32.totalorder %s160, %s174
      %p176 = scmp.eq.s32.totalorder %s40, 0
      %p177 = por %p175, %p176
      %s179 = sadd.s32 %s178, 1
      %p182 = scmp.eq.s32.totalorder %s34, 1
      %p183 = scmp.ne.s32.totalorder %s178, %s180
      %p184 = scmp.eq.s32.totalorder %s34, 0
      %p185 = por %p183, %p184
      %p186 = scmp.ne.s32.totalorder %s178, %s180
      %p187 = scmp.eq.s32.totalorder %s39, 1
      %p188 = por %p186, %p187
      %p189 = scmp.ne.s32.totalorder %s180, %s181
      %p190 = scmp.eq.s32.totalorder %s39, 0
      %p191 = por %p189, %p190
      %p192 = scmp.ne.s32.totalorder %s180, %s181
      %p193 = scmp.eq.s32.totalorder %s40, 1
      %p194 = por %p192, %p193
      %p196 = scmp.ne.s32.totalorder %s181, %s195
      %p197 = scmp.eq.s32.totalorder %s40, 0
      %p198 = por %p196, %p197
      %s200 = sadd.s32 %s199, 1
      %p203 = scmp.eq.s32.totalorder %s34, 1
      %p204 = scmp.ne.s32.totalorder %s199, %s201
      %p205 = scmp.eq.s32.totalorder %s34, 0
      %p206 = por %p204, %p205
      %p207 = scmp.ne.s32.totalorder %s199, %s201
      %p208 = scmp.eq.s32.totalorder %s39, 1
      %p209 = por %p207, %p208
      %p210 = scmp.ne.s32.totalorder %s201, %s202
      %p211 = scmp.eq.s32.totalorder %s39, 0
      %p212 = por %p210, %p211
      %p213 = scmp.ne.s32.totalorder %s201, %s202
      %p214 = scmp.eq.s32.totalorder %s40, 1
      %p215 = por %p213, %p214
      %p217 = scmp.ne.s32.totalorder %s202, %s216
      %p218 = scmp.eq.s32.totalorder %s40, 0
      %p219 = por %p217, %p218
      %s221 = sadd.s32 %s220, 1
      %p224 = scmp.eq.s32.totalorder %s34, 1
      %p225 = scmp.ne.s32.totalorder %s220, %s222
      %p226 = scmp.eq.s32.totalorder %s34, 0
      %p227 = por %p225, %p226
      %p228 = scmp.ne.s32.totalorder %s220, %s222
      %p229 = scmp.eq.s32.totalorder %s39, 1
      %p230 = por %p228, %p229
      %p231 = scmp.ne.s32.totalorder %s222, %s223
      %p232 = scmp.eq.s32.totalorder %s39, 0
      %p233 = por %p231, %p232
      %p234 = scmp.ne.s32.totalorder %s222, %s223
      %p235 = scmp.eq.s32.totalorder %s40, 1
      %p236 = por %p234, %p235
      %p238 = scmp.ne.s32.totalorder %s223, %s237
      %p239 = scmp.eq.s32.totalorder %s40, 0
      %p240 = por %p238, %p239
      %s242 = sadd.s32 %s241, 1
      %p245 = scmp.eq.s32.totalorder %s34, 1
      %p246 = scmp.ne.s32.totalorder %s241, %s243
      %p247 = scmp.eq.s32.totalorder %s34, 0
      %p248 = por %p246, %p247
      %p249 = scmp.ne.s32.totalorder %s241, %s243
      %p250 = scmp.eq.s32.totalorder %s39, 1
      %p251 = por %p249, %p250
      %p252 = scmp.ne.s32.totalorder %s243, %s244
      %p253 = scmp.eq.s32.totalorder %s39, 0
      %p254 = por %p252, %p253
      %p255 = scmp.ne.s32.totalorder %s243, %s244
      %p256 = scmp.eq.s32.totalorder %s40, 1
      %p257 = por %p255, %p256
      %p259 = scmp.ne.s32.totalorder %s244, %s258
      %p260 = scmp.eq.s32.totalorder %s40, 0
      %p261 = por %p259, %p260
      %s263 = sadd.s32 %s262, 1
      %p266 = scmp.eq.s32.totalorder %s34, 1
      %p267 = scmp.ne.s32.totalorder %s262, %s264
      %p268 = scmp.eq.s32.totalorder %s34, 0
      %p269 = por %p267, %p268
      %p270 = scmp.ne.s32.totalorder %s262, %s264
      %p271 = scmp.eq.s32.totalorder %s39, 1
      %p272 = por %p270, %p271
      %p273 = scmp.ne.s32.totalorder %s264, %s265
      %p274 = scmp.eq.s32.totalorder %s39, 0
      %p275 = por %p273, %p274
      %p276 = scmp.ne.s32.totalorder %s264, %s265
      %p277 = scmp.eq.s32.totalorder %s40, 1
      %p278 = por %p276, %p277
      %p280 = scmp.ne.s32.totalorder %s265, %s279
      %p281 = scmp.eq.s32.totalorder %s40, 0
      %p282 = por %p280, %p281
      %s284 = sadd.s32 %s283, 1
      %p287 = scmp.eq.s32.totalorder %s34, 1
      %p288 = scmp.ne.s32.totalorder %s283, %s285
      %p289 = scmp.eq.s32.totalorder %s34, 0
      %p290 = por %p288, %p289
      %p291 = scmp.ne.s32.totalorder %s283, %s285
      %p292 = scmp.eq.s32.totalorder %s39, 1
      %p293 = por %p291, %p292
      %p294 = scmp.ne.s32.totalorder %s285, %s286
      %p295 = scmp.eq.s32.totalorder %s39, 0
      %p296 = por %p294, %p295
      %p297 = scmp.ne.s32.totalorder %s285, %s286
      %p298 = scmp.eq.s32.totalorder %s40, 1
      %p299 = por %p297, %p298
      %p301 = scmp.ne.s32.totalorder %s286, %s300
      %p302 = scmp.eq.s32.totalorder %s40, 0
      %p303 = por %p301, %p302
      %s304 = ssub.s32 %s34, %s41
      %p305 = scmp.eq.s32.totalorder %s304, 0
      %s307 = sadd.s32 %s306, 1
      %s308 = scalar_select %p305, %s306, %s307
      %p311 = pneg %p305
      %p312 = scmp.eq.s32.totalorder %s34, 1
      %p313 = por %p311, %p312
      %p314 = scmp.ne.s32.totalorder %s306, %s309
      %p315 = scmp.eq.s32.totalorder %s34, 0
      %p316 = por %p314, %p315
      %p317 = scmp.ne.s32.totalorder %s306, %s309
      %p318 = scmp.eq.s32.totalorder %s39, 1
      %p319 = por %p317, %p318
      %p320 = scmp.ne.s32.totalorder %s309, %s310
      %p321 = scmp.eq.s32.totalorder %s39, 0
      %p322 = por %p320, %p321
      %p323 = scmp.ne.s32.totalorder %s309, %s310
      %p324 = scmp.eq.s32.totalorder %s40, 1
      %p325 = por %p323, %p324
      %p327 = scmp.ne.s32.totalorder %s310, %s326
      %p328 = scmp.eq.s32.totalorder %s40, 0
      %p329 = por %p327, %p328
      %s330 = ssub.s32 %s34, %s41
      %p331 = scmp.eq.s32.totalorder %s330, 0
      %s333 = sadd.s32 %s332, 1
      %s334 = scalar_select %p331, %s332, %s333
      %p337 = pneg %p331
      %p338 = scmp.eq.s32.totalorder %s34, 1
      %p339 = por %p337, %p338
      %p340 = scmp.ne.s32.totalorder %s332, %s335
      %p341 = scmp.eq.s32.totalorder %s34, 0
      %p342 = por %p340, %p341
      %p343 = scmp.ne.s32.totalorder %s332, %s335
      %p344 = scmp.eq.s32.totalorder %s39, 1
      %p345 = por %p343, %p344
      %p346 = scmp.ne.s32.totalorder %s335, %s336
      %p347 = scmp.eq.s32.totalorder %s39, 0
      %p348 = por %p346, %p347
      %p349 = scmp.ne.s32.totalorder %s335, %s336
      %p350 = scmp.eq.s32.totalorder %s40, 1
      %p351 = por %p349, %p350
      %p353 = scmp.ne.s32.totalorder %s336, %s352
      %p354 = scmp.eq.s32.totalorder %s40, 0
      %p355 = por %p353, %p354
      %p356 = scmp.le.s32.totalorder 1, %s34
      %p357 = scmp.lt.s32.totalorder %s34, 3
      %p358 = pnand %p356, %p357
      %p359 = pneg %p358
      // Predicated region
      $region9: #{tpu_custom_call.1} parent=5 // pred_check
        _
      $region10: #{tpu_custom_call.1} parent=5 // pred_check_branch
        %361 = sbr.rel (%p358) target = $region12
      $region11: #{tpu_custom_call.1} parent=5 // pred_region
        %s362 = ssub.s32 %s34, 1
        // Predicated region
        $region13: #{tpu_custom_call.1} parent=11 // pred_check
          %p363 = pneg %p107
        $region14: #{tpu_custom_call.1} parent=11 // pred_check_branch
          %365 = sbr.rel (%p363) target = $region16
        $region15: #{tpu_custom_call.1} parent=11 // pred_region
          _
        $region16: #{tpu_custom_call.1} parent=11 // pred_fallthru
          _
        // Predicated region
        $region17: #{tpu_custom_call.1} parent=11 // pred_check
          %p366 = pneg %p128
        $region18: #{tpu_custom_call.1} parent=11 // pred_check_branch
          %368 = sbr.rel (%p366) target = $region20
        $region19: #{tpu_custom_call.1} parent=11 // pred_region
          _
        $region20: #{tpu_custom_call.1} parent=11 // pred_fallthru
          _
        // Predicated region
        $region21: #{tpu_custom_call.1} parent=11 // pred_check
          %p369 = pneg %p149
        $region22: #{tpu_custom_call.1} parent=11 // pred_check_branch
          %371 = sbr.rel (%p369) target = $region24
        $region23: #{tpu_custom_call.1} parent=11 // pred_region
          %s373 = ssub.s32 512, 512
          %374 = vsyncadd [#allocation6], %s373
          %s375 = sshll.u32 [#allocation7], 4
          %s376 = int_to_ptr.vmem [resolvable:$true] %s375
          %381 = dma.hbm_to_vmem [thread:$0]  %s4, 512, %s376, [#allocation6], 128, 128, 8
        $region24: #{tpu_custom_call.1} parent=11 // pred_fallthru
          _
        // Predicated region
        $region25: #{tpu_custom_call.1} parent=11 // pred_check
          %p382 = pneg %p170
        $region26: #{tpu_custom_call.1} parent=11 // pred_check_branch
          %384 = sbr.rel (%p382) target = $region28
        $region27: #{tpu_custom_call.1} parent=11 // pred_region
          %s386 = ssub.s32 16, 16
          %387 = vsyncadd [#allocation9], %s386
          %s389 = sshll.u32 [#allocation8], 4
          %s390 = int_to_ptr.vmem [resolvable:$true] %s389
          %392 = dma.hbm_to_vmem [thread:$0]  %s5, 16, %s390, [#allocation9]
        $region28: #{tpu_custom_call.1} parent=11 // pred_fallthru
          _
        // Predicated region
        $region29: #{tpu_custom_call.1} parent=11 // pred_check
          %p393 = pneg %p191
        $region30: #{tpu_custom_call.1} parent=11 // pred_check_branch
          %395 = sbr.rel (%p393) target = $region32
        $region31: #{tpu_custom_call.1} parent=11 // pred_region
          %s397 = ssub.s32 512, 512
          %398 = vsyncadd [#allocation9], %s397
          %s399 = sshll.u32 [#allocation10], 4
          %s400 = int_to_ptr.vmem [resolvable:$true] %s399
          %405 = dma.hbm_to_vmem [thread:$0]  %s6, 512, %s400, [#allocation9], 128, 128, 8
        $region32: #{tpu_custom_call.1} parent=11 // pred_fallthru
          _
        // Predicated region
        $region33: #{tpu_custom_call.1} parent=11 // pred_check
          %p406 = pneg %p212
        $region34: #{tpu_custom_call.1} parent=11 // pred_check_branch
          %408 = sbr.rel (%p406) target = $region36
        $region35: #{tpu_custom_call.1} parent=11 // pred_region
          %s410 = ssub.s32 16, 16
          %411 = vsyncadd [#allocation12], %s410
          %s413 = sshll.u32 [#allocation11], 4
          %s414 = int_to_ptr.vmem [resolvable:$true] %s413
          %416 = dma.hbm_to_vmem [thread:$0]  %s7, 16, %s414, [#allocation12]
        $region36: #{tpu_custom_call.1} parent=11 // pred_fallthru
          _
        // Predicated region
        $region37: #{tpu_custom_call.1} parent=11 // pred_check
          %p417 = pneg %p233
        $region38: #{tpu_custom_call.1} parent=11 // pred_check_branch
          %419 = sbr.rel (%p417) target = $region40
        $region39: #{tpu_custom_call.1} parent=11 // pred_region
          _
        $region40: #{tpu_custom_call.1} parent=11 // pred_fallthru
          _
        // Predicated region
        $region41: #{tpu_custom_call.1} parent=11 // pred_check
          %p420 = pneg %p254
        $region42: #{tpu_custom_call.1} parent=11 // pred_check_branch
          %422 = sbr.rel (%p420) target = $region44
        $region43: #{tpu_custom_call.1} parent=11 // pred_region
          %s424 = ssub.s32 16, 16
          %425 = vsyncadd [#allocation12], %s424
          %s427 = sshll.u32 [#allocation13], 4
          %s428 = int_to_ptr.vmem [resolvable:$true] %s427
          %430 = dma.hbm_to_vmem [thread:$0]  %s9, 16, %s428, [#allocation12]
        $region44: #{tpu_custom_call.1} parent=11 // pred_fallthru
          _
        // Predicated region
        $region45: #{tpu_custom_call.1} parent=11 // pred_check
          %p431 = pneg %p275
        $region46: #{tpu_custom_call.1} parent=11 // pred_check_branch
          %433 = sbr.rel (%p431) target = $region48
        $region47: #{tpu_custom_call.1} parent=11 // pred_region
          _
        $region48: #{tpu_custom_call.1} parent=11 // pred_fallthru
          _
        // Predicated region
        $region49: #{tpu_custom_call.1} parent=11 // pred_check
          %p434 = pneg %p296
        $region50: #{tpu_custom_call.1} parent=11 // pred_check_branch
          %436 = sbr.rel (%p434) target = $region52
        $region51: #{tpu_custom_call.1} parent=11 // pred_region
          _
        $region52: #{tpu_custom_call.1} parent=11 // pred_fallthru
          _
      $region12: #{tpu_custom_call.1} parent=5 // pred_fallthru
        _
      %p437 = scmp.lt.s32.totalorder %s34, 2
      // Predicated region
      $region53: #{tpu_custom_call.1} parent=5 // pred_check
        %p438 = pneg %p437
      $region54: #{tpu_custom_call.1} parent=5 // pred_check_branch
        %440 = sbr.rel (%p438) target = $region56
      $region55: #{tpu_custom_call.1} parent=5 // pred_region
        // Predicated region
        $region57: #{tpu_custom_call.1} parent=55 // pred_check
          %p441 = pneg %p54
        $region58: #{tpu_custom_call.1} parent=55 // pred_check_branch
          %443 = sbr.rel (%p441) target = $region60
        $region59: #{tpu_custom_call.1} parent=55 // pred_region
          %s444 = sand.u32 %s44, 1
          %s445 = scalar_lea.sflag [#allocation3], %s444
          %s446 = sand.u32 %s44, 1
          %s447 = smul.addr %s446, 8
          %s448 = scalar_lea.vmem [#allocation2], %s447
          %s450 = ssub.s32 128, 128
          %451 = vsyncadd %s445, %s450
          %s452 = smul.addr %s34, 128
          %s453 = scalar_lea.hbm %s0, %s452
          %s455 = sshll.u32 %s448, 4
          %s456 = int_to_ptr.vmem [resolvable:$true] %s455
          %458 = dma.hbm_to_vmem [thread:$0]  %s453, 128, %s456, %s445
        $region60: #{tpu_custom_call.1} parent=55 // pred_fallthru
          _
        // Predicated region
        $region61: #{tpu_custom_call.1} parent=55 // pred_check
          %p459 = pneg %p80
        $region62: #{tpu_custom_call.1} parent=55 // pred_check_branch
          %461 = sbr.rel (%p459) target = $region64
        $region63: #{tpu_custom_call.1} parent=55 // pred_region
          %s462 = sand.u32 %s34, 1
          %s463 = scalar_lea.sflag [#allocation6], %s462
          %s464 = sand.u32 %s70, 1
          %s465 = smul.addr %s464, 64
          %s466 = scalar_lea.vmem [#allocation5], %s465
          %s467 = smul.u32 8, %s34
          %s469 = ssub.s32 1024, 1024
          %470 = vsyncadd %s463, %s469
          %s471 = smul.addr %s467, 128
          %s472 = scalar_lea.hbm %s1, %s471
          %s473 = sshll.u32 %s466, 4
          %s474 = int_to_ptr.vmem [resolvable:$true] %s473
          %479 = dma.hbm_to_vmem [thread:$0]  %s472, 1024, %s474, %s463, 128, 128, 8
        $region64: #{tpu_custom_call.1} parent=55 // pred_fallthru
          _
      $region56: #{tpu_custom_call.1} parent=5 // pred_fallthru
        _
      %p480 = scmp.le.s32.totalorder 1, %s34
      %p481 = scmp.lt.s32.totalorder %s34, 3
      %p482 = pnand %p480, %p481
      %p483 = pneg %p482
      // Predicated region
      $region65: #{tpu_custom_call.1} parent=5 // pred_check
        _
      $region66: #{tpu_custom_call.1} parent=5 // pred_check_branch
        %485 = sbr.rel (%p482) target = $region68
      $region67: #{tpu_custom_call.1} parent=5 // pred_region
        %s486 = ssub.s32 %s34, 1
        %s487 = sand.u32 %s47, 1
        %s488 = scalar_lea.sflag [#allocation3], %s487
        %s489 = sand.u32 %s47, 1
        %s490 = smul.addr %s489, 8
        %s491 = scalar_lea.vmem [#allocation2], %s490
        // Predicated region
        $region69: #{tpu_custom_call.1} parent=67 // pred_check
          %p492 = pneg %p60
        $region70: #{tpu_custom_call.1} parent=67 // pred_check_branch
          %494 = sbr.rel (%p492) target = $region72
        $region71: #{tpu_custom_call.1} parent=67 // pred_region
          %495 = dma.done %s488, 128
        $region72: #{tpu_custom_call.1} parent=67 // pred_fallthru
          _
        %s496 = sand.u32 %s39, 1
        %s497 = scalar_lea.sflag [#allocation6], %s496
        %s498 = sand.u32 %s73, 1
        %s499 = smul.addr %s498, 64
        %s500 = scalar_lea.vmem [#allocation5], %s499
        // Predicated region
        $region73: #{tpu_custom_call.1} parent=67 // pred_check
          %p501 = pneg %p86
        $region74: #{tpu_custom_call.1} parent=67 // pred_check_branch
          %503 = sbr.rel (%p501) target = $region76
        $region75: #{tpu_custom_call.1} parent=67 // pred_region
          %504 = dma.done %s497, 1024
        $region76: #{tpu_custom_call.1} parent=67 // pred_fallthru
          _
        // Predicated region
        $region77: #{tpu_custom_call.1} parent=67 // pred_check
          %p505 = pneg %p149
        $region78: #{tpu_custom_call.1} parent=67 // pred_check_branch
          %507 = sbr.rel (%p505) target = $region80
        $region79: #{tpu_custom_call.1} parent=67 // pred_region
          %508 = dma.done [#allocation6], 512
        $region80: #{tpu_custom_call.1} parent=67 // pred_fallthru
          _
        // Predicated region
        $region81: #{tpu_custom_call.1} parent=67 // pred_check
          %p509 = pneg %p170
        $region82: #{tpu_custom_call.1} parent=67 // pred_check_branch
          %511 = sbr.rel (%p509) target = $region84
        $region83: #{tpu_custom_call.1} parent=67 // pred_region
          %512 = dma.done [#allocation9], 16
        $region84: #{tpu_custom_call.1} parent=67 // pred_fallthru
          _
        // Predicated region
        $region85: #{tpu_custom_call.1} parent=67 // pred_check
          %p513 = pneg %p191
        $region86: #{tpu_custom_call.1} parent=67 // pred_check_branch
          %515 = sbr.rel (%p513) target = $region88
        $region87: #{tpu_custom_call.1} parent=67 // pred_region
          %516 = dma.done [#allocation9], 512
        $region88: #{tpu_custom_call.1} parent=67 // pred_fallthru
          _
        // Predicated region
        $region89: #{tpu_custom_call.1} parent=67 // pred_check
          %p517 = pneg %p212
        $region90: #{tpu_custom_call.1} parent=67 // pred_check_branch
          %519 = sbr.rel (%p517) target = $region92
        $region91: #{tpu_custom_call.1} parent=67 // pred_region
          %520 = dma.done [#allocation12], 16
        $region92: #{tpu_custom_call.1} parent=67 // pred_fallthru
          _
        // Predicated region
        $region93: #{tpu_custom_call.1} parent=67 // pred_check
          %p521 = pneg %p254
        $region94: #{tpu_custom_call.1} parent=67 // pred_check_branch
          %523 = sbr.rel (%p521) target = $region96
        $region95: #{tpu_custom_call.1} parent=67 // pred_region
          %524 = dma.done [#allocation12], 16
        $region96: #{tpu_custom_call.1} parent=67 // pred_fallthru
          _
        %s525 = sand.u32 %s47, 1
        %s526 = scalar_lea.sflag [#allocation3], %s525
        %s527 = sand.u32 %s47, 1
        %s528 = smul.addr %s527, 8
        %s529 = scalar_lea.vmem [#allocation2], %s528
        %p530 = pneg %p60
        %p531 = pneg %p57
        %s532 = sand.u32 %s39, 1
        %s533 = scalar_lea.sflag [#allocation6], %s532
        %s534 = sand.u32 %s73, 1
        %s535 = smul.addr %s534, 64
        %s536 = scalar_lea.vmem [#allocation5], %s535
        %p537 = pneg %p86
        %p538 = pneg %p83
        %p539 = pneg %p107
        %p540 = pneg %p104
        %p541 = pneg %p128
        %p542 = pneg %p125
        %p543 = pneg %p149
        %p544 = pneg %p146
        %p545 = pneg %p170
        %p546 = pneg %p167
        %p547 = pneg %p191
        %p548 = pneg %p188
        %p549 = pneg %p212
        %p550 = pneg %p209
        %p551 = pneg %p233
        %p552 = pneg %p230
        %p553 = pneg %p254
        %p554 = pneg %p251
        %p555 = pneg %p275
        %p556 = pneg %p272
        %p557 = pneg %p296
        %p558 = pneg %p293
        %p559 = pneg %p322
        %p560 = pneg %p319
        %s561 = sand.u32 %s309, 1
        %s562 = scalar_lea.sflag [#allocation4], %s561
        %s563 = sand.u32 %s309, 1
        %s564 = smul.addr %s563, 8
        %s565 = scalar_lea.vmem [#allocation14], %s564
        %p566 = pneg %p348
        %p567 = pneg %p345
        %s568 = sand.u32 %s335, 1
        %s569 = scalar_lea.sflag [#allocation16], %s568
        %s570 = sand.u32 %s335, 1
        %s571 = smul.addr %s570, 8
        %s572 = scalar_lea.vmem [#allocation15], %s571
        %s573 = smul.u32 8, %s39
        %v574 = vld [vmem:[%s500] sm:$0xff]
        %v575 = vld [vmem:[%s500 + $0x8] sm:$0xff]
        %v576 = vld [vmem:[%s500 + $0x10] sm:$0xff]
        %v577 = vld [vmem:[%s500 + $0x18] sm:$0xff]
        %v578 = vld [vmem:[%s500 + $0x20] sm:$0xff]
        %v579 = vld [vmem:[%s500 + $0x28] sm:$0xff]
        %v580 = vld [vmem:[%s500 + $0x30] sm:$0xff]
        %v581 = vld [vmem:[%s500 + $0x38] sm:$0xff]
        %v582 = vld [vmem:[%s491] sm:$0xff]
        %v583 = vld [vmem:[%s2] sm:$0xff]
        %v584 = vld [vmem:[%s2 + $0x8] sm:$0xff]
        %v585 = vld [vmem:[%s2 + $0x10] sm:$0xff]
        %v586 = vld [vmem:[%s2 + $0x18] sm:$0xff]
        %v587 = vld [vmem:[%s3] sm:$0x1]
        %v589 = vlaneseq
        %v590 = vshrl.u32 %v589, 7
        %v591 = vsub.s32 0, %v590
        %v592 = vrot.slane %v587, %v591
        %vm594 = vcmask 261120
        %v596 = vsel %vm594, %v582, 0
        %598 = vmatprep.subr.mxu0 0.0
        %599 = vmatpush1.msra.mxu0 %v583
        %600 = vmatprep.subr.mxu0 0.0
        %601 = vmatpush1.msra.mxu0 %v584
        %602 = vmatprep.subr.mxu0 0.0
        %603 = vmatpush1.msra.mxu0 %v585
        %604 = vmatprep.subr.mxu0 0.0
        %605 = vmatpush1.msra.mxu0 %v586
        %606 = vmatprep.subr.mxu0 0.0
        %607 = vmatpush1.msra.mxu0 0.0
        %608 = vmatprep.subr.mxu0 0.0
        %609 = vmatpush1.msra.mxu0 0.0
        %610 = vmatprep.subr.mxu0 0.0
        %611 = vmatpush1.msra.mxu0 0.0
        %612 = vmatprep.subr.mxu0 0.0
        %613 = vmatpush1.msra.mxu0 0.0
        %614 = vmatprep.subr.mxu0 0.0
        %615 = vmatpush1.msra.mxu0 0.0
        %616 = vmatprep.subr.mxu0 0.0
        %617 = vmatpush1.msra.mxu0 0.0
        %618 = vmatprep.subr.mxu0 0.0
        %619 = vmatpush1.msra.mxu0 0.0
        %620 = vmatprep.subr.mxu0 0.0
        %621 = vmatpush1.msra.mxu0 0.0
        %622 = vmatprep.subr.mxu0 0.0
        %623 = vmatpush1.msra.mxu0 0.0
        %624 = vmatprep.subr.mxu0 0.0
        %625 = vmatpush1.msra.mxu0 0.0
        %626 = vmatprep.subr.mxu0 0.0
        %627 = vmatpush1.msra.mxu0 0.0
        %628 = vmatprep.subr.mxu0 0.0
        %629 = vmatpush1.msra.mxu0 0.0
        %630 = vmatprep.subr.mxu0 0.0
        %631 = vmatpush1.msra.mxu0 0.0
        %632 = vmatprep.subr.mxu0 0.0
        %633 = vmatpush1.msra.mxu0 0.0
        %634 = vmatprep.subr.mxu0 0.0
        %635 = vmatpush1.msra.mxu0 0.0
        %636 = vmatprep.subr.mxu0 0.0
        %637 = vmatpush1.msra.mxu0 0.0
        %638 = vmatprep.subr.mxu0 0.0
        %639 = vmatpush1.msra.mxu0 0.0
        %640 = vmatprep.subr.mxu0 0.0
        %641 = vmatpush1.msra.mxu0 0.0
        %642 = vmatprep.subr.mxu0 0.0
        %643 = vmatpush1.msra.mxu0 0.0
        %644 = vmatprep.subr.mxu0 0.0
        %645 = vmatpush1.msra.mxu0 0.0
        %646 = vmatprep.subr.mxu0 0.0
        %647 = vmatpush1.msra.mxu0 0.0
        %648 = vmatprep.subr.mxu0 0.0
        %649 = vmatpush1.msra.mxu0 0.0
        %650 = vmatprep.subr.mxu0 0.0
        %651 = vmatpush1.msra.mxu0 0.0
        %652 = vmatprep.subr.mxu0 0.0
        %653 = vmatpush1.msra.mxu0 0.0
        %654 = vmatprep.subr.mxu0 0.0
        %655 = vmatpush1.msra.mxu0 0.0
        %656 = vmatprep.subr.mxu0 0.0
        %657 = vmatpush1.msra.mxu0 0.0
        %658 = vmatprep.subr.mxu0 0.0
        %659 = vmatpush1.msra.mxu0 0.0
        %660 = vmatprep.subr.mxu0 0.0
        %661 = vmatpush1.msra.mxu0 0.0
        %662 = vmatprep.mubr.f32.mxu0 0.0
        %663 = vmatmul.mubr.f32.gmra.mrb[0].mxu0 %v596
        %v664 = vpop.f32.mrb[0].mxu0
        %v665 = vadd.f32 %v592, %v664
        %v666 = vpop.f32.mrb[0].mxu0
        %667 = vdwg.mxu0
        %v668 = vld [vmem:[#allocation7] sm:$0xff]
        %v669 = vld [vmem:[#allocation7 + $0x8] sm:$0xff]
        %v670 = vld [vmem:[#allocation7 + $0x10] sm:$0xff]
        %v671 = vld [vmem:[#allocation7 + $0x18] sm:$0xff]
        %v672 = vld [vmem:[#allocation8] sm:$0x1]
        %v674 = vlaneseq
        %v675 = vshrl.u32 %v674, 7
        %v676 = vsub.s32 0, %v675
        %v677 = vrot.slane %v672, %v676
        %v680 = vsel %vm594, %v574, 0
        %v683 = vsel %vm594, %v575, 0
        %v686 = vsel %vm594, %v576, 0
        %v689 = vsel %vm594, %v577, 0
        %v692 = vsel %vm594, %v578, 0
        %v695 = vsel %vm594, %v579, 0
        %v698 = vsel %vm594, %v580, 0
        %v701 = vsel %vm594, %v581, 0
        %703 = vmatprep.subr.mxu0 0.0
        %704 = vmatpush1.msra.mxu0 %v668
        %705 = vmatprep.subr.mxu0 0.0
        %706 = vmatpush1.msra.mxu0 %v669
        %707 = vmatprep.subr.mxu0 0.0
        %708 = vmatpush1.msra.mxu0 %v670
        %709 = vmatprep.subr.mxu0 0.0
        %710 = vmatpush1.msra.mxu0 %v671
        %711 = vmatprep.subr.mxu0 0.0
        %712 = vmatpush1.msra.mxu0 0.0
        %713 = vmatprep.subr.mxu0 0.0
        %714 = vmatpush1.msra.mxu0 0.0
        %715 = vmatprep.subr.mxu0 0.0
        %716 = vmatpush1.msra.mxu0 0.0
        %717 = vmatprep.subr.mxu0 0.0
        %718 = vmatpush1.msra.mxu0 0.0
        %719 = vmatprep.subr.mxu0 0.0
        %720 = vmatpush1.msra.mxu0 0.0
        %721 = vmatprep.subr.mxu0 0.0
        %722 = vmatpush1.msra.mxu0 0.0
        %723 = vmatprep.subr.mxu0 0.0
        %724 = vmatpush1.msra.mxu0 0.0
        %725 = vmatprep.subr.mxu0 0.0
        %726 = vmatpush1.msra.mxu0 0.0
        %727 = vmatprep.subr.mxu0 0.0
        %728 = vmatpush1.msra.mxu0 0.0
        %729 = vmatprep.subr.mxu0 0.0
        %730 = vmatpush1.msra.mxu0 0.0
        %731 = vmatprep.subr.mxu0 0.0
        %732 = vmatpush1.msra.mxu0 0.0
        %733 = vmatprep.subr.mxu0 0.0
        %734 = vmatpush1.msra.mxu0 0.0
        %735 = vmatprep.subr.mxu0 0.0
        %736 = vmatpush1.msra.mxu0 0.0
        %737 = vmatprep.subr.mxu0 0.0
        %738 = vmatpush1.msra.mxu0 0.0
        %739 = vmatprep.subr.mxu0 0.0
        %740 = vmatpush1.msra.mxu0 0.0
        %741 = vmatprep.subr.mxu0 0.0
        %742 = vmatpush1.msra.mxu0 0.0
        %743 = vmatprep.subr.mxu0 0.0
        %744 = vmatpush1.msra.mxu0 0.0
        %745 = vmatprep.subr.mxu0 0.0
        %746 = vmatpush1.msra.mxu0 0.0
        %747 = vmatprep.subr.mxu0 0.0
        %748 = vmatpush1.msra.mxu0 0.0
        %749 = vmatprep.subr.mxu0 0.0
        %750 = vmatpush1.msra.mxu0 0.0
        %751 = vmatprep.subr.mxu0 0.0
        %752 = vmatpush1.msra.mxu0 0.0
        %753 = vmatprep.subr.mxu0 0.0
        %754 = vmatpush1.msra.mxu0 0.0
        %755 = vmatprep.subr.mxu0 0.0
        %756 = vmatpush1.msra.mxu0 0.0
        %757 = vmatprep.subr.mxu0 0.0
        %758 = vmatpush1.msra.mxu0 0.0
        %759 = vmatprep.subr.mxu0 0.0
        %760 = vmatpush1.msra.mxu0 0.0
        %761 = vmatprep.subr.mxu0 0.0
        %762 = vmatpush1.msra.mxu0 0.0
        %763 = vmatprep.subr.mxu0 0.0
        %764 = vmatpush1.msra.mxu0 0.0
        %765 = vmatprep.subr.mxu0 0.0
        %766 = vmatpush1.msra.mxu0 0.0
        %767 = vmatprep.mubr.f32.mxu0 0.0
        %768 = vmatmul.mubr.f32.gmra.mrb[0].mxu0 %v680
        %v769 = vpop.f32.mrb[0].mxu0
        %v770 = vadd.f32 %v677, %v769
        %v771 = vpop.f32.mrb[0].mxu0
        %772 = vmatprep.mubr.f32.mxu0 0.0
        %773 = vmatmul.mubr.f32.gmra.mrb[0].mxu0 %v683
        %v774 = vpop.f32.mrb[0].mxu0
        %v775 = vadd.f32 %v677, %v774
        %v776 = vpop.f32.mrb[0].mxu0
        %777 = vmatprep.mubr.f32.mxu0 0.0
        %778 = vmatmul.mubr.f32.gmra.mrb[0].mxu0 %v686
        %v779 = vpop.f32.mrb[0].mxu0
        %v780 = vadd.f32 %v677, %v779
        %v781 = vpop.f32.mrb[0].mxu0
        %782 = vmatprep.mubr.f32.mxu0 0.0
        %783 = vmatmul.mubr.f32.gmra.mrb[0].mxu0 %v689
        %v784 = vpop.f32.mrb[0].mxu0
        %v785 = vadd.f32 %v677, %v784
        %v786 = vpop.f32.mrb[0].mxu0
        %787 = vmatprep.mubr.f32.mxu0 0.0
        %788 = vmatmul.mubr.f32.gmra.mrb[0].mxu0 %v692
        %v789 = vpop.f32.mrb[0].mxu0
        %v790 = vadd.f32 %v677, %v789
        %v791 = vpop.f32.mrb[0].mxu0
        %792 = vmatprep.mubr.f32.mxu0 0.0
        %793 = vmatmul.mubr.f32.gmra.mrb[0].mxu0 %v695
        %v794 = vpop.f32.mrb[0].mxu0
        %v795 = vadd.f32 %v677, %v794
        %v796 = vpop.f32.mrb[0].mxu0
        %797 = vmatprep.mubr.f32.mxu0 0.0
        %798 = vmatmul.mubr.f32.gmra.mrb[0].mxu0 %v698
        %v799 = vpop.f32.mrb[0].mxu0
        %v800 = vadd.f32 %v677, %v799
        %v801 = vpop.f32.mrb[0].mxu0
        %802 = vmatprep.mubr.f32.mxu0 0.0
        %803 = vmatmul.mubr.f32.gmra.mrb[0].mxu0 %v701
        %v804 = vpop.f32.mrb[0].mxu0
        %v805 = vadd.f32 %v677, %v804
        %v806 = vpop.f32.mrb[0].mxu0
        %807 = vdwg.mxu0
        %v808 = vld [vmem:[#allocation10] sm:$0xff]
        %v809 = vld [vmem:[#allocation10 + $0x8] sm:$0xff]
        %v810 = vld [vmem:[#allocation10 + $0x10] sm:$0xff]
        %v811 = vld [vmem:[#allocation10 + $0x18] sm:$0xff]
        %v812 = vld [vmem:[#allocation11] sm:$0x1]
        %v814 = vlaneseq
        %v815 = vshrl.u32 %v814, 7
        %v816 = vsub.s32 0, %v815
        %v817 = vrot.slane %v812, %v816
        %819 = vmatprep.subr.mxu0 0.0
        %820 = vmatpush1.msra.mxu0 %v808
        %821 = vmatprep.subr.mxu0 0.0
        %822 = vmatpush1.msra.mxu0 %v809
        %823 = vmatprep.subr.mxu0 0.0
        %824 = vmatpush1.msra.mxu0 %v810
        %825 = vmatprep.subr.mxu0 0.0
        %826 = vmatpush1.msra.mxu0 %v811
        %827 = vmatprep.subr.mxu0 0.0
        %828 = vmatpush1.msra.mxu0 0.0
        %829 = vmatprep.subr.mxu0 0.0
        %830 = vmatpush1.msra.mxu0 0.0
        %831 = vmatprep.subr.mxu0 0.0
        %832 = vmatpush1.msra.mxu0 0.0
        %833 = vmatprep.subr.mxu0 0.0
        %834 = vmatpush1.msra.mxu0 0.0
        %835 = vmatprep.subr.mxu0 0.0
        %836 = vmatpush1.msra.mxu0 0.0
        %837 = vmatprep.subr.mxu0 0.0
        %838 = vmatpush1.msra.mxu0 0.0
        %839 = vmatprep.subr.mxu0 0.0
        %840 = vmatpush1.msra.mxu0 0.0
        %841 = vmatprep.subr.mxu0 0.0
        %842 = vmatpush1.msra.mxu0 0.0
        %843 = vmatprep.subr.mxu0 0.0
        %844 = vmatpush1.msra.mxu0 0.0
        %845 = vmatprep.subr.mxu0 0.0
        %846 = vmatpush1.msra.mxu0 0.0
        %847 = vmatprep.subr.mxu0 0.0
        %848 = vmatpush1.msra.mxu0 0.0
        %849 = vmatprep.subr.mxu0 0.0
        %850 = vmatpush1.msra.mxu0 0.0
        %851 = vmatprep.subr.mxu0 0.0
        %852 = vmatpush1.msra.mxu0 0.0
        %853 = vmatprep.subr.mxu0 0.0
        %854 = vmatpush1.msra.mxu0 0.0
        %855 = vmatprep.subr.mxu0 0.0
        %856 = vmatpush1.msra.mxu0 0.0
        %857 = vmatprep.subr.mxu0 0.0
        %858 = vmatpush1.msra.mxu0 0.0
        %859 = vmatprep.subr.mxu0 0.0
        %860 = vmatpush1.msra.mxu0 0.0
        %861 = vmatprep.subr.mxu0 0.0
        %862 = vmatpush1.msra.mxu0 0.0
        %863 = vmatprep.subr.mxu0 0.0
        %864 = vmatpush1.msra.mxu0 0.0
        %865 = vmatprep.subr.mxu0 0.0
        %866 = vmatpush1.msra.mxu0 0.0
        %867 = vmatprep.subr.mxu0 0.0
        %868 = vmatpush1.msra.mxu0 0.0
        %869 = vmatprep.subr.mxu0 0.0
        %870 = vmatpush1.msra.mxu0 0.0
        %871 = vmatprep.subr.mxu0 0.0
        %872 = vmatpush1.msra.mxu0 0.0
        %873 = vmatprep.subr.mxu0 0.0
        %874 = vmatpush1.msra.mxu0 0.0
        %875 = vmatprep.subr.mxu0 0.0
        %876 = vmatpush1.msra.mxu0 0.0
        %877 = vmatprep.subr.mxu0 0.0
        %878 = vmatpush1.msra.mxu0 0.0
        %879 = vmatprep.subr.mxu0 0.0
        %880 = vmatpush1.msra.mxu0 0.0
        %881 = vmatprep.subr.mxu0 0.0
        %882 = vmatpush1.msra.mxu0 0.0
        %883 = vmatprep.mubr.f32.mxu0 0.0
        %884 = vmatmul.mubr.f32.gmra.mrb[0].mxu0 %v680
        %v885 = vpop.f32.mrb[0].mxu0
        %v886 = vadd.f32 %v817, %v885
        %v887 = vpop.f32.mrb[0].mxu0
        %888 = vmatprep.mubr.f32.mxu0 0.0
        %889 = vmatmul.mubr.f32.gmra.mrb[0].mxu0 %v683
        %v890 = vpop.f32.mrb[0].mxu0
        %v891 = vadd.f32 %v817, %v890
        %v892 = vpop.f32.mrb[0].mxu0
        %893 = vmatprep.mubr.f32.mxu0 0.0
        %894 = vmatmul.mubr.f32.gmra.mrb[0].mxu0 %v686
        %v895 = vpop.f32.mrb[0].mxu0
        %v896 = vadd.f32 %v817, %v895
        %v897 = vpop.f32.mrb[0].mxu0
        %898 = vmatprep.mubr.f32.mxu0 0.0
        %899 = vmatmul.mubr.f32.gmra.mrb[0].mxu0 %v689
        %v900 = vpop.f32.mrb[0].mxu0
        %v901 = vadd.f32 %v817, %v900
        %v902 = vpop.f32.mrb[0].mxu0
        %903 = vmatprep.mubr.f32.mxu0 0.0
        %904 = vmatmul.mubr.f32.gmra.mrb[0].mxu0 %v692
        %v905 = vpop.f32.mrb[0].mxu0
        %v906 = vadd.f32 %v817, %v905
        %v907 = vpop.f32.mrb[0].mxu0
        %908 = vmatprep.mubr.f32.mxu0 0.0
        %909 = vmatmul.mubr.f32.gmra.mrb[0].mxu0 %v695
        %v910 = vpop.f32.mrb[0].mxu0
        %v911 = vadd.f32 %v817, %v910
        %v912 = vpop.f32.mrb[0].mxu0
        %913 = vmatprep.mubr.f32.mxu0 0.0
        %914 = vmatmul.mubr.f32.gmra.mrb[0].mxu0 %v698
        %v915 = vpop.f32.mrb[0].mxu0
        %v916 = vadd.f32 %v817, %v915
        %v917 = vpop.f32.mrb[0].mxu0
        %918 = vmatprep.mubr.f32.mxu0 0.0
        %919 = vmatmul.mubr.f32.gmra.mrb[0].mxu0 %v701
        %v920 = vpop.f32.mrb[0].mxu0
        %v921 = vadd.f32 %v817, %v920
        %v922 = vpop.f32.mrb[0].mxu0
        %923 = vdwg.mxu0
        %v925 = vcombine.high %v665, %v665
        %v927 = vunpack.c.l.s4 1966171168
        %v928 = vunpack.c.0.s8 %v927
        %v929 = vlaneseq
        %v930 = vshrl.u32 %v929, 7
        %v931 = vsub.s32 %v928, %v930
        %v932 = vrot.slane %v665, %v931
        %v934 = vunpack.c.l.s4 1966171168
        %v935 = vunpack.c.0.s8 %v934
        %v936 = vlaneseq
        %v937 = vshrl.u32 %v936, 7
        %v938 = vsub.s32 %v935, %v937
        %v939 = vrot.slane %v925, %v938
        %v940 = vcombine.high %v932, %v932
        %v941 = vcombine.high %v939, %v939
        %v943 = vunpack.c.l.s4 1966171168
        %v944 = vunpack.c.0.s8 %v943
        %v945 = vlaneseq
        %v946 = vshrl.u32 %v945, 7
        %v947 = vsub.s32 %v944, %v946
        %v948 = vrot.slane %v932, %v947
        %v950 = vunpack.c.l.s4 1966171168
        %v951 = vunpack.c.0.s8 %v950
        %v952 = vlaneseq
        %v953 = vshrl.u32 %v952, 7
        %v954 = vsub.s32 %v951, %v953
        %v955 = vrot.slane %v939, %v954
        %v957 = vunpack.c.l.s4 1966171168
        %v958 = vunpack.c.0.s8 %v957
        %v959 = vlaneseq
        %v960 = vshrl.u32 %v959, 7
        %v961 = vsub.s32 %v958, %v960
        %v962 = vrot.slane %v940, %v961
        %v964 = vunpack.c.l.s4 1966171168
        %v965 = vunpack.c.0.s8 %v964
        %v966 = vlaneseq
        %v967 = vshrl.u32 %v966, 7
        %v968 = vsub.s32 %v965, %v967
        %v969 = vrot.slane %v941, %v968
        %v970 = vcombine.high %v948, %v948
        %v971 = vcombine.high %v955, %v955
        %v972 = vcombine.high %v962, %v962
        %v973 = vcombine.high %v969, %v969
        %v974 = vlaneseq
        %v975 = vshrl.u32 %v974, 7
        %v976 = vsub.s32 0, %v975
        %v977 = vrot.slane %v948, %v976
        %v978 = vlaneseq
        %v979 = vshrl.u32 %v978, 7
        %v980 = vsub.s32 0, %v979
        %v981 = vrot.slane %v962, %v980
        %v982 = vlaneseq
        %v983 = vshrl.u32 %v982, 7
        %v984 = vsub.s32 0, %v983
        %v985 = vrot.slane %v970, %v984
        %v986 = vlaneseq
        %v987 = vshrl.u32 %v986, 7
        %v988 = vsub.s32 0, %v987
        %v989 = vrot.slane %v972, %v988
        %v990 = vlaneseq
        %v991 = vshrl.u32 %v990, 7
        %v992 = vsub.s32 0, %v991
        %v993 = vrot.slane %v955, %v992
        %v994 = vlaneseq
        %v995 = vshrl.u32 %v994, 7
        %v996 = vsub.s32 0, %v995
        %v997 = vrot.slane %v969, %v996
        %v998 = vlaneseq
        %v999 = vshrl.u32 %v998, 7
        %v1000 = vsub.s32 0, %v999
        %v1001 = vrot.slane %v971, %v1000
        %v1002 = vlaneseq
        %v1003 = vshrl.u32 %v1002, 7
        %v1004 = vsub.s32 0, %v1003
        %v1005 = vrot.slane %v973, %v1004
        %v1014 = vmul.f32 %v977, %v770
        %v1015 = vmul.f32 %v981, %v775
        %v1016 = vmul.f32 %v985, %v780
        %v1017 = vmul.f32 %v989, %v785
        %v1018 = vmul.f32 %v993, %v790
        %v1019 = vmul.f32 %v997, %v795
        %v1020 = vmul.f32 %v1001, %v800
        %v1021 = vmul.f32 %v1005, %v805
        %v1022 = vld [vmem:[%s10] sm:$0xff]
        %v1023 = vld [vmem:[%s10 + $0x8] sm:$0xff]
        %v1024 = vld [vmem:[%s10 + $0x10] sm:$0xff]
        %v1025 = vld [vmem:[%s10 + $0x18] sm:$0xff]
        %v1027 = vsel %vm594, %v1014, 0
        %v1030 = vsel %vm594, %v1015, 0
        %v1033 = vsel %vm594, %v1016, 0
        %v1036 = vsel %vm594, %v1017, 0
        %v1039 = vsel %vm594, %v1018, 0
        %v1042 = vsel %vm594, %v1019, 0
        %v1045 = vsel %vm594, %v1020, 0
        %v1048 = vsel %vm594, %v1021, 0
        %1050 = vmatprep.subr.mxu0 0.0
        %1051 = vmatpush1.msra.mxu0 %v1022
        %1052 = vmatprep.subr.mxu0 0.0
        %1053 = vmatpush1.msra.mxu0 %v1023
        %1054 = vmatprep.subr.mxu0 0.0
        %1055 = vmatpush1.msra.mxu0 %v1024
        %1056 = vmatprep.subr.mxu0 0.0
        %1057 = vmatpush1.msra.mxu0 %v1025
        %1058 = vmatprep.subr.mxu0 0.0
        %1059 = vmatpush1.msra.mxu0 0.0
        %1060 = vmatprep.subr.mxu0 0.0
        %1061 = vmatpush1.msra.mxu0 0.0
        %1062 = vmatprep.subr.mxu0 0.0
        %1063 = vmatpush1.msra.mxu0 0.0
        %1064 = vmatprep.subr.mxu0 0.0
        %1065 = vmatpush1.msra.mxu0 0.0
        %1066 = vmatprep.subr.mxu0 0.0
        %1067 = vmatpush1.msra.mxu0 0.0
        %1068 = vmatprep.subr.mxu0 0.0
        %1069 = vmatpush1.msra.mxu0 0.0
        %1070 = vmatprep.subr.mxu0 0.0
        %1071 = vmatpush1.msra.mxu0 0.0
        %1072 = vmatprep.subr.mxu0 0.0
        %1073 = vmatpush1.msra.mxu0 0.0
        %1074 = vmatprep.subr.mxu0 0.0
        %1075 = vmatpush1.msra.mxu0 0.0
        %1076 = vmatprep.subr.mxu0 0.0
        %1077 = vmatpush1.msra.mxu0 0.0
        %1078 = vmatprep.subr.mxu0 0.0
        %1079 = vmatpush1.msra.mxu0 0.0
        %1080 = vmatprep.subr.mxu0 0.0
        %1081 = vmatpush1.msra.mxu0 0.0
        %1082 = vmatprep.subr.mxu0 0.0
        %1083 = vmatpush1.msra.mxu0 0.0
        %1084 = vmatprep.subr.mxu0 0.0
        %1085 = vmatpush1.msra.mxu0 0.0
        %1086 = vmatprep.subr.mxu0 0.0
        %1087 = vmatpush1.msra.mxu0 0.0
        %1088 = vmatprep.subr.mxu0 0.0
        %1089 = vmatpush1.msra.mxu0 0.0
        %1090 = vmatprep.subr.mxu0 0.0
        %1091 = vmatpush1.msra.mxu0 0.0
        %1092 = vmatprep.subr.mxu0 0.0
        %1093 = vmatpush1.msra.mxu0 0.0
        %1094 = vmatprep.subr.mxu0 0.0
        %1095 = vmatpush1.msra.mxu0 0.0
        %1096 = vmatprep.subr.mxu0 0.0
        %1097 = vmatpush1.msra.mxu0 0.0
        %1098 = vmatprep.subr.mxu0 0.0
        %1099 = vmatpush1.msra.mxu0 0.0
        %1100 = vmatprep.subr.mxu0 0.0
        %1101 = vmatpush1.msra.mxu0 0.0
        %1102 = vmatprep.subr.mxu0 0.0
        %1103 = vmatpush1.msra.mxu0 0.0
        %1104 = vmatprep.subr.mxu0 0.0
        %1105 = vmatpush1.msra.mxu0 0.0
        %1106 = vmatprep.subr.mxu0 0.0
        %1107 = vmatpush1.msra.mxu0 0.0
        %1108 = vmatprep.subr.mxu0 0.0
        %1109 = vmatpush1.msra.mxu0 0.0
        %1110 = vmatprep.subr.mxu0 0.0
        %1111 = vmatpush1.msra.mxu0 0.0
        %1112 = vmatprep.subr.mxu0 0.0
        %1113 = vmatpush1.msra.mxu0 0.0
        %1114 = vmatprep.mubr.f32.mxu0 0.0
        %1115 = vmatmul.mubr.f32.gmra.mrb[0].mxu0 %v1027
        %v1116 = vpop.f32.mrb[0].mxu0
        %v1117 = vadd.f32 0.0, %v1116
        %v1118 = vpop.f32.mrb[0].mxu0
        %1119 = vmatprep.mubr.f32.mxu0 0.0
        %1120 = vmatmul.mubr.f32.gmra.mrb[0].mxu0 %v1030
        %v1121 = vpop.f32.mrb[0].mxu0
        %v1122 = vadd.f32 0.0, %v1121
        %v1123 = vpop.f32.mrb[0].mxu0
        %1124 = vmatprep.mubr.f32.mxu0 0.0
        %1125 = vmatmul.mubr.f32.gmra.mrb[0].mxu0 %v1033
        %v1126 = vpop.f32.mrb[0].mxu0
        %v1127 = vadd.f32 0.0, %v1126
        %v1128 = vpop.f32.mrb[0].mxu0
        %1129 = vmatprep.mubr.f32.mxu0 0.0
        %1130 = vmatmul.mubr.f32.gmra.mrb[0].mxu0 %v1036
        %v1131 = vpop.f32.mrb[0].mxu0
        %v1132 = vadd.f32 0.0, %v1131
        %v1133 = vpop.f32.mrb[0].mxu0
        %1134 = vmatprep.mubr.f32.mxu0 0.0
        %1135 = vmatmul.mubr.f32.gmra.mrb[0].mxu0 %v1039
        %v1136 = vpop.f32.mrb[0].mxu0
        %v1137 = vadd.f32 0.0, %v1136
        %v1138 = vpop.f32.mrb[0].mxu0
        %1139 = vmatprep.mubr.f32.mxu0 0.0
        %1140 = vmatmul.mubr.f32.gmra.mrb[0].mxu0 %v1042
        %v1141 = vpop.f32.mrb[0].mxu0
        %v1142 = vadd.f32 0.0, %v1141
        %v1143 = vpop.f32.mrb[0].mxu0
        %1144 = vmatprep.mubr.f32.mxu0 0.0
        %1145 = vmatmul.mubr.f32.gmra.mrb[0].mxu0 %v1045
        %v1146 = vpop.f32.mrb[0].mxu0
        %v1147 = vadd.f32 0.0, %v1146
        %v1148 = vpop.f32.mrb[0].mxu0
        %1149 = vmatprep.mubr.f32.mxu0 0.0
        %1150 = vmatmul.mubr.f32.gmra.mrb[0].mxu0 %v1048
        %v1151 = vpop.f32.mrb[0].mxu0
        %v1152 = vadd.f32 0.0, %v1151
        %v1153 = vpop.f32.mrb[0].mxu0
        %1154 = vdwg.mxu0
        %vm1155 = vcmask 64512
        %v1156 = vsel %vm1155, %v1117, -inf
        %v1157 = vrot.slane %v1156, 4
        %v1158 = vmax.f32 %v1156, %v1157
        %v1159 = vrot.slane %v1158, 2
        %v1160 = vmax.f32 %v1158, %v1159
        %v1161 = vrot.slane %v1160, 1
        %v1162 = vmax.f32 %v1160, %v1161
        %v1163 = vsel %vm1155, %v1122, -inf
        %v1164 = vrot.slane %v1163, 4
        %v1165 = vmax.f32 %v1163, %v1164
        %v1166 = vrot.slane %v1165, 2
        %v1167 = vmax.f32 %v1165, %v1166
        %v1168 = vrot.slane %v1167, 1
        %v1169 = vmax.f32 %v1167, %v1168
        %v1170 = vsel %vm1155, %v1127, -inf
        %v1171 = vrot.slane %v1170, 4
        %v1172 = vmax.f32 %v1170, %v1171
        %v1173 = vrot.slane %v1172, 2
        %v1174 = vmax.f32 %v1172, %v1173
        %v1175 = vrot.slane %v1174, 1
        %v1176 = vmax.f32 %v1174, %v1175
        %v1177 = vsel %vm1155, %v1132, -inf
        %v1178 = vrot.slane %v1177, 4
        %v1179 = vmax.f32 %v1177, %v1178
        %v1180 = vrot.slane %v1179, 2
        %v1181 = vmax.f32 %v1179, %v1180
        %v1182 = vrot.slane %v1181, 1
        %v1183 = vmax.f32 %v1181, %v1182
        %v1184 = vsel %vm1155, %v1137, -inf
        %v1185 = vrot.slane %v1184, 4
        %v1186 = vmax.f32 %v1184, %v1185
        %v1187 = vrot.slane %v1186, 2
        %v1188 = vmax.f32 %v1186, %v1187
        %v1189 = vrot.slane %v1188, 1
        %v1190 = vmax.f32 %v1188, %v1189
        %v1191 = vsel %vm1155, %v1142, -inf
        %v1192 = vrot.slane %v1191, 4
        %v1193 = vmax.f32 %v1191, %v1192
        %v1194 = vrot.slane %v1193, 2
        %v1195 = vmax.f32 %v1193, %v1194
        %v1196 = vrot.slane %v1195, 1
        %v1197 = vmax.f32 %v1195, %v1196
        %v1198 = vsel %vm1155, %v1147, -inf
        %v1199 = vrot.slane %v1198, 4
        %v1200 = vmax.f32 %v1198, %v1199
        %v1201 = vrot.slane %v1200, 2
        %v1202 = vmax.f32 %v1200, %v1201
        %v1203 = vrot.slane %v1202, 1
        %v1204 = vmax.f32 %v1202, %v1203
        %v1205 = vsel %vm1155, %v1152, -inf
        %v1206 = vrot.slane %v1205, 4
        %v1207 = vmax.f32 %v1205, %v1206
        %v1208 = vrot.slane %v1207, 2
        %v1209 = vmax.f32 %v1207, %v1208
        %v1210 = vrot.slane %v1209, 1
        %v1211 = vmax.f32 %v1209, %v1210
        %v1212 = vsub.f32 %v1117, %v1162
        %v1213 = vsub.f32 %v1122, %v1169
        %v1214 = vsub.f32 %v1127, %v1176
        %v1215 = vsub.f32 %v1132, %v1183
        %v1216 = vsub.f32 %v1137, %v1190
        %v1217 = vsub.f32 %v1142, %v1197
        %v1218 = vsub.f32 %v1147, %v1204
        %v1219 = vsub.f32 %v1152, %v1211
        %v1220 = vmul.f32 %v1212, 1.442695
        %v1221 = vpow.pop %v1220
        %v1222 = vmul.f32 %v1213, 1.442695
        %v1223 = vpow.pop %v1222
        %v1224 = vmul.f32 %v1214, 1.442695
        %v1225 = vpow.pop %v1224
        %v1226 = vmul.f32 %v1215, 1.442695
        %v1227 = vpow.pop %v1226
        %v1228 = vmul.f32 %v1216, 1.442695
        %v1229 = vpow.pop %v1228
        %v1230 = vmul.f32 %v1217, 1.442695
        %v1231 = vpow.pop %v1230
        %v1232 = vmul.f32 %v1218, 1.442695
        %v1233 = vpow.pop %v1232
        %v1234 = vmul.f32 %v1219, 1.442695
        %v1235 = vpow.pop %v1234
        %v1236 = vsel %vm1155, %v1221, 0.0
        %v1237 = vrot.slane %v1236, 4
        %v1238 = vadd.f32 %v1236, %v1237
        %v1239 = vrot.slane %v1238, 2
        %v1240 = vadd.f32 %v1238, %v1239
        %v1241 = vrot.slane %v1240, 1
        %v1242 = vadd.f32 %v1240, %v1241
        %v1243 = vsel %vm1155, %v1223, 0.0
        %v1244 = vrot.slane %v1243, 4
        %v1245 = vadd.f32 %v1243, %v1244
        %v1246 = vrot.slane %v1245, 2
        %v1247 = vadd.f32 %v1245, %v1246
        %v1248 = vrot.slane %v1247, 1
        %v1249 = vadd.f32 %v1247, %v1248
        %v1250 = vsel %vm1155, %v1225, 0.0
        %v1251 = vrot.slane %v1250, 4
        %v1252 = vadd.f32 %v1250, %v1251
        %v1253 = vrot.slane %v1252, 2
        %v1254 = vadd.f32 %v1252, %v1253
        %v1255 = vrot.slane %v1254, 1
        %v1256 = vadd.f32 %v1254, %v1255
        %v1257 = vsel %vm1155, %v1227, 0.0
        %v1258 = vrot.slane %v1257, 4
        %v1259 = vadd.f32 %v1257, %v1258
        %v1260 = vrot.slane %v1259, 2
        %v1261 = vadd.f32 %v1259, %v1260
        %v1262 = vrot.slane %v1261, 1
        %v1263 = vadd.f32 %v1261, %v1262
        %v1264 = vsel %vm1155, %v1229, 0.0
        %v1265 = vrot.slane %v1264, 4
        %v1266 = vadd.f32 %v1264, %v1265
        %v1267 = vrot.slane %v1266, 2
        %v1268 = vadd.f32 %v1266, %v1267
        %v1269 = vrot.slane %v1268, 1
        %v1270 = vadd.f32 %v1268, %v1269
        %v1271 = vsel %vm1155, %v1231, 0.0
        %v1272 = vrot.slane %v1271, 4
        %v1273 = vadd.f32 %v1271, %v1272
        %v1274 = vrot.slane %v1273, 2
        %v1275 = vadd.f32 %v1273, %v1274
        %v1276 = vrot.slane %v1275, 1
        %v1277 = vadd.f32 %v1275, %v1276
        %v1278 = vsel %vm1155, %v1233, 0.0
        %v1279 = vrot.slane %v1278, 4
        %v1280 = vadd.f32 %v1278, %v1279
        %v1281 = vrot.slane %v1280, 2
        %v1282 = vadd.f32 %v1280, %v1281
        %v1283 = vrot.slane %v1282, 1
        %v1284 = vadd.f32 %v1282, %v1283
        %v1285 = vsel %vm1155, %v1235, 0.0
        %v1286 = vrot.slane %v1285, 4
        %v1287 = vadd.f32 %v1285, %v1286
        %v1288 = vrot.slane %v1287, 2
        %v1289 = vadd.f32 %v1287, %v1288
        %v1290 = vrot.slane %v1289, 1
        %v1291 = vadd.f32 %v1289, %v1290
        %v1292 = vrcp.pop %v1242
        %v1293 = vrcp.pop %v1249
        %v1294 = vrcp.pop %v1256
        %v1295 = vrcp.pop %v1263
        %v1296 = vrcp.pop %v1270
        %v1297 = vrcp.pop %v1277
        %v1298 = vrcp.pop %v1284
        %v1299 = vrcp.pop %v1291
        %v1300 = vmul.f32 %v1221, %v1292
        %v1301 = vmul.f32 %v1223, %v1293
        %v1302 = vmul.f32 %v1225, %v1294
        %v1303 = vmul.f32 %v1227, %v1295
        %v1304 = vmul.f32 %v1229, %v1296
        %v1305 = vmul.f32 %v1231, %v1297
        %v1306 = vmul.f32 %v1233, %v1298
        %v1307 = vmul.f32 %v1235, %v1299
        %v1308 = vld [vmem:[%s11] sm:$0xff]
        %v1310 = vsel %vm1155, %v1300, 0
        %v1313 = vsel %vm1155, %v1301, 0
        %v1316 = vsel %vm1155, %v1302, 0
        %v1319 = vsel %vm1155, %v1303, 0
        %v1322 = vsel %vm1155, %v1304, 0
        %v1325 = vsel %vm1155, %v1305, 0
        %v1328 = vsel %vm1155, %v1306, 0
        %v1331 = vsel %vm1155, %v1307, 0
        %1333 = vmatprep.subr.mxu0 0.0
        %1334 = vmatpush1.msra.mxu0 %v1308
        %1335 = vmatprep.subr.mxu0 0.0
        %1336 = vmatpush1.msra.mxu0 0.0
        %1337 = vmatprep.subr.mxu0 0.0
        %1338 = vmatpush1.msra.mxu0 0.0
        %1339 = vmatprep.subr.mxu0 0.0
        %1340 = vmatpush1.msra.mxu0 0.0
        %1341 = vmatprep.subr.mxu0 0.0
        %1342 = vmatpush1.msra.mxu0 0.0
        %1343 = vmatprep.subr.mxu0 0.0
        %1344 = vmatpush1.msra.mxu0 0.0
        %1345 = vmatprep.subr.mxu0 0.0
        %1346 = vmatpush1.msra.mxu0 0.0
        %1347 = vmatprep.subr.mxu0 0.0
        %1348 = vmatpush1.msra.mxu0 0.0
        %1349 = vmatprep.subr.mxu0 0.0
        %1350 = vmatpush1.msra.mxu0 0.0
        %1351 = vmatprep.subr.mxu0 0.0
        %1352 = vmatpush1.msra.mxu0 0.0
        %1353 = vmatprep.subr.mxu0 0.0
        %1354 = vmatpush1.msra.mxu0 0.0
        %1355 = vmatprep.subr.mxu0 0.0
        %1356 = vmatpush1.msra.mxu0 0.0
        %1357 = vmatprep.subr.mxu0 0.0
        %1358 = vmatpush1.msra.mxu0 0.0
        %1359 = vmatprep.subr.mxu0 0.0
        %1360 = vmatpush1.msra.mxu0 0.0
        %1361 = vmatprep.subr.mxu0 0.0
        %1362 = vmatpush1.msra.mxu0 0.0
        %1363 = vmatprep.subr.mxu0 0.0
        %1364 = vmatpush1.msra.mxu0 0.0
        %1365 = vmatprep.subr.mxu0 0.0
        %1366 = vmatpush1.msra.mxu0 0.0
        %1367 = vmatprep.subr.mxu0 0.0
        %1368 = vmatpush1.msra.mxu0 0.0
        %1369 = vmatprep.subr.mxu0 0.0
        %1370 = vmatpush1.msra.mxu0 0.0
        %1371 = vmatprep.subr.mxu0 0.0
        %1372 = vmatpush1.msra.mxu0 0.0
        %1373 = vmatprep.subr.mxu0 0.0
        %1374 = vmatpush1.msra.mxu0 0.0
        %1375 = vmatprep.subr.mxu0 0.0
        %1376 = vmatpush1.msra.mxu0 0.0
        %1377 = vmatprep.subr.mxu0 0.0
        %1378 = vmatpush1.msra.mxu0 0.0
        %1379 = vmatprep.subr.mxu0 0.0
        %1380 = vmatpush1.msra.mxu0 0.0
        %1381 = vmatprep.subr.mxu0 0.0
        %1382 = vmatpush1.msra.mxu0 0.0
        %1383 = vmatprep.subr.mxu0 0.0
        %1384 = vmatpush1.msra.mxu0 0.0
        %1385 = vmatprep.subr.mxu0 0.0
        %1386 = vmatpush1.msra.mxu0 0.0
        %1387 = vmatprep.subr.mxu0 0.0
        %1388 = vmatpush1.msra.mxu0 0.0
        %1389 = vmatprep.subr.mxu0 0.0
        %1390 = vmatpush1.msra.mxu0 0.0
        %1391 = vmatprep.subr.mxu0 0.0
        %1392 = vmatpush1.msra.mxu0 0.0
        %1393 = vmatprep.subr.mxu0 0.0
        %1394 = vmatpush1.msra.mxu0 0.0
        %1395 = vmatprep.subr.mxu0 0.0
        %1396 = vmatpush1.msra.mxu0 0.0
        %1397 = vmatprep.mubr.f32.mxu0 0.0
        %1398 = vmatmul.mubr.f32.gmra.mrb[0].mxu0 %v1310
        %v1399 = vpop.f32.mrb[0].mxu0
        %v1400 = vadd.f32 0.0, %v1399
        %v1401 = vpop.f32.mrb[0].mxu0
        %1402 = vmatprep.mubr.f32.mxu0 0.0
        %1403 = vmatmul.mubr.f32.gmra.mrb[0].mxu0 %v1313
        %v1404 = vpop.f32.mrb[0].mxu0
        %v1405 = vadd.f32 0.0, %v1404
        %v1406 = vpop.f32.mrb[0].mxu0
        %1407 = vmatprep.mubr.f32.mxu0 0.0
        %1408 = vmatmul.mubr.f32.gmra.mrb[0].mxu0 %v1316
        %v1409 = vpop.f32.mrb[0].mxu0
        %v1410 = vadd.f32 0.0, %v1409
        %v1411 = vpop.f32.mrb[0].mxu0
        %1412 = vmatprep.mubr.f32.mxu0 0.0
        %1413 = vmatmul.mubr.f32.gmra.mrb[0].mxu0 %v1319
        %v1414 = vpop.f32.mrb[0].mxu0
        %v1415 = vadd.f32 0.0, %v1414
        %v1416 = vpop.f32.mrb[0].mxu0
        %1417 = vmatprep.mubr.f32.mxu0 0.0
        %1418 = vmatmul.mubr.f32.gmra.mrb[0].mxu0 %v1322
        %v1419 = vpop.f32.mrb[0].mxu0
        %v1420 = vadd.f32 0.0, %v1419
        %v1421 = vpop.f32.mrb[0].mxu0
        %1422 = vmatprep.mubr.f32.mxu0 0.0
        %1423 = vmatmul.mubr.f32.gmra.mrb[0].mxu0 %v1325
        %v1424 = vpop.f32.mrb[0].mxu0
        %v1425 = vadd.f32 0.0, %v1424
        %v1426 = vpop.f32.mrb[0].mxu0
        %1427 = vmatprep.mubr.f32.mxu0 0.0
        %1428 = vmatmul.mubr.f32.gmra.mrb[0].mxu0 %v1328
        %v1429 = vpop.f32.mrb[0].mxu0
        %v1430 = vadd.f32 0.0, %v1429
        %v1431 = vpop.f32.mrb[0].mxu0
        %1432 = vmatprep.mubr.f32.mxu0 0.0
        %1433 = vmatmul.mubr.f32.gmra.mrb[0].mxu0 %v1331
        %v1434 = vpop.f32.mrb[0].mxu0
        %v1435 = vadd.f32 0.0, %v1434
        %v1436 = vpop.f32.mrb[0].mxu0
        %1437 = vdwg.mxu0
        %v1438 = vmul.f32 %v1400, %v886
        %v1439 = vmul.f32 %v1405, %v891
        %v1440 = vmul.f32 %v1410, %v896
        %v1441 = vmul.f32 %v1415, %v901
        %v1442 = vmul.f32 %v1420, %v906
        %v1443 = vmul.f32 %v1425, %v911
        %v1444 = vmul.f32 %v1430, %v916
        %v1445 = vmul.f32 %v1435, %v921
        %v1446 = vsel %vm594, %v1438, 0.0
        %v1447 = vrot.slane %v1446, 4
        %v1448 = vadd.f32 %v1446, %v1447
        %v1449 = vrot.slane %v1448, 2
        %v1450 = vadd.f32 %v1448, %v1449
        %v1451 = vrot.slane %v1450, 1
        %v1452 = vadd.f32 %v1450, %v1451
        %v1453 = vsel %vm594, %v1439, 0.0
        %v1454 = vrot.slane %v1453, 4
        %v1455 = vadd.f32 %v1453, %v1454
        %v1456 = vrot.slane %v1455, 2
        %v1457 = vadd.f32 %v1455, %v1456
        %v1458 = vrot.slane %v1457, 1
        %v1459 = vadd.f32 %v1457, %v1458
        %v1460 = vsel %vm594, %v1440, 0.0
        %v1461 = vrot.slane %v1460, 4
        %v1462 = vadd.f32 %v1460, %v1461
        %v1463 = vrot.slane %v1462, 2
        %v1464 = vadd.f32 %v1462, %v1463
        %v1465 = vrot.slane %v1464, 1
        %v1466 = vadd.f32 %v1464, %v1465
        %v1467 = vsel %vm594, %v1441, 0.0
        %v1468 = vrot.slane %v1467, 4
        %v1469 = vadd.f32 %v1467, %v1468
        %v1470 = vrot.slane %v1469, 2
        %v1471 = vadd.f32 %v1469, %v1470
        %v1472 = vrot.slane %v1471, 1
        %v1473 = vadd.f32 %v1471, %v1472
        %v1474 = vsel %vm594, %v1442, 0.0
        %v1475 = vrot.slane %v1474, 4
        %v1476 = vadd.f32 %v1474, %v1475
        %v1477 = vrot.slane %v1476, 2
        %v1478 = vadd.f32 %v1476, %v1477
        %v1479 = vrot.slane %v1478, 1
        %v1480 = vadd.f32 %v1478, %v1479
        %v1481 = vsel %vm594, %v1443, 0.0
        %v1482 = vrot.slane %v1481, 4
        %v1483 = vadd.f32 %v1481, %v1482
        %v1484 = vrot.slane %v1483, 2
        %v1485 = vadd.f32 %v1483, %v1484
        %v1486 = vrot.slane %v1485, 1
        %v1487 = vadd.f32 %v1485, %v1486
        %v1488 = vsel %vm594, %v1444, 0.0
        %v1489 = vrot.slane %v1488, 4
        %v1490 = vadd.f32 %v1488, %v1489
        %v1491 = vrot.slane %v1490, 2
        %v1492 = vadd.f32 %v1490, %v1491
        %v1493 = vrot.slane %v1492, 1
        %v1494 = vadd.f32 %v1492, %v1493
        %v1495 = vsel %vm594, %v1445, 0.0
        %v1496 = vrot.slane %v1495, 4
        %v1497 = vadd.f32 %v1495, %v1496
        %v1498 = vrot.slane %v1497, 2
        %v1499 = vadd.f32 %v1497, %v1498
        %v1500 = vrot.slane %v1499, 1
        %v1501 = vadd.f32 %v1499, %v1500
        %v1502 = vld [vmem:[%s8] sm:$0xff]
        %v1503 = vld [vmem:[%s8 + $0x8] sm:$0xff]
        %v1504 = vld [vmem:[%s8 + $0x10] sm:$0xff]
        %v1505 = vld [vmem:[%s8 + $0x18] sm:$0xff]
        %v1506 = vld [vmem:[#allocation13] sm:$0x1]
        %v1508 = vlaneseq
        %v1509 = vshrl.u32 %v1508, 7
        %v1510 = vsub.s32 0, %v1509
        %v1511 = vrot.slane %v1506, %v1510
        %vm1521 = vcmask 1041409
        %v1522 = vsel %vm1521, %v1459, %v1452
        %vm1523 = vcmask 1042434
        %v1524 = vsel %vm1523, %v1466, %v1522
        %vm1525 = vcmask 1043459
        %v1526 = vsel %vm1525, %v1473, %v1524
        %vm1527 = vcmask 1044484
        %v1528 = vsel %vm1527, %v1480, %v1526
        %vm1529 = vcmask 1045509
        %v1530 = vsel %vm1529, %v1487, %v1528
        %vm1531 = vcmask 1046534
        %v1532 = vsel %vm1531, %v1494, %v1530
        %vm1533 = vcmask 1047559
        %v1534 = vsel %vm1533, %v1501, %v1532
        %v1535 = vsel %vm594, %v1534, 0
        %1537 = vmatprep.subr.mxu0 0.0
        %1538 = vmatpush1.msra.mxu0 %v1502
        %1539 = vmatprep.subr.mxu0 0.0
        %1540 = vmatpush1.msra.mxu0 %v1503
        %1541 = vmatprep.subr.mxu0 0.0
        %1542 = vmatpush1.msra.mxu0 %v1504
        %1543 = vmatprep.subr.mxu0 0.0
        %1544 = vmatpush1.msra.mxu0 %v1505
        %1545 = vmatprep.subr.mxu0 0.0
        %1546 = vmatpush1.msra.mxu0 0.0
        %1547 = vmatprep.subr.mxu0 0.0
        %1548 = vmatpush1.msra.mxu0 0.0
        %1549 = vmatprep.subr.mxu0 0.0
        %1550 = vmatpush1.msra.mxu0 0.0
        %1551 = vmatprep.subr.mxu0 0.0
        %1552 = vmatpush1.msra.mxu0 0.0
        %1553 = vmatprep.subr.mxu0 0.0
        %1554 = vmatpush1.msra.mxu0 0.0
        %1555 = vmatprep.subr.mxu0 0.0
        %1556 = vmatpush1.msra.mxu0 0.0
        %1557 = vmatprep.subr.mxu0 0.0
        %1558 = vmatpush1.msra.mxu0 0.0
        %1559 = vmatprep.subr.mxu0 0.0
        %1560 = vmatpush1.msra.mxu0 0.0
        %1561 = vmatprep.subr.mxu0 0.0
        %1562 = vmatpush1.msra.mxu0 0.0
        %1563 = vmatprep.subr.mxu0 0.0
        %1564 = vmatpush1.msra.mxu0 0.0
        %1565 = vmatprep.subr.mxu0 0.0
        %1566 = vmatpush1.msra.mxu0 0.0
        %1567 = vmatprep.subr.mxu0 0.0
        %1568 = vmatpush1.msra.mxu0 0.0
        %1569 = vmatprep.subr.mxu0 0.0
        %1570 = vmatpush1.msra.mxu0 0.0
        %1571 = vmatprep.subr.mxu0 0.0
        %1572 = vmatpush1.msra.mxu0 0.0
        %1573 = vmatprep.subr.mxu0 0.0
        %1574 = vmatpush1.msra.mxu0 0.0
        %1575 = vmatprep.subr.mxu0 0.0
        %1576 = vmatpush1.msra.mxu0 0.0
        %1577 = vmatprep.subr.mxu0 0.0
        %1578 = vmatpush1.msra.mxu0 0.0
        %1579 = vmatprep.subr.mxu0 0.0
        %1580 = vmatpush1.msra.mxu0 0.0
        %1581 = vmatprep.subr.mxu0 0.0
        %1582 = vmatpush1.msra.mxu0 0.0
        %1583 = vmatprep.subr.mxu0 0.0
        %1584 = vmatpush1.msra.mxu0 0.0
        %1585 = vmatprep.subr.mxu0 0.0
        %1586 = vmatpush1.msra.mxu0 0.0
        %1587 = vmatprep.subr.mxu0 0.0
        %1588 = vmatpush1.msra.mxu0 0.0
        %1589 = vmatprep.subr.mxu0 0.0
        %1590 = vmatpush1.msra.mxu0 0.0
        %1591 = vmatprep.subr.mxu0 0.0
        %1592 = vmatpush1.msra.mxu0 0.0
        %1593 = vmatprep.subr.mxu0 0.0
        %1594 = vmatpush1.msra.mxu0 0.0
        %1595 = vmatprep.subr.mxu0 0.0
        %1596 = vmatpush1.msra.mxu0 0.0
        %1597 = vmatprep.subr.mxu0 0.0
        %1598 = vmatpush1.msra.mxu0 0.0
        %1599 = vmatprep.subr.mxu0 0.0
        %1600 = vmatpush1.msra.mxu0 0.0
        %1601 = vmatprep.mubr.f32.mxu0 0.0
        %1602 = vmatmul.mubr.f32.gmra.mrb[0].mxu0 %v1535
        %v1603 = vpop.f32.mrb[0].mxu0
        %v1604 = vadd.f32 %v1511, %v1603
        %v1605 = vpop.f32.mrb[0].mxu0
        %1606 = vdwg.mxu0
        %v1608 = vcombine.high %v1604, %v1604
        %v1610 = vunpack.c.l.s4 1966171168
        %v1611 = vunpack.c.0.s8 %v1610
        %v1612 = vlaneseq
        %v1613 = vshrl.u32 %v1612, 7
        %v1614 = vsub.s32 %v1611, %v1613
        %v1615 = vrot.slane %v1604, %v1614
        %v1617 = vunpack.c.l.s4 1966171168
        %v1618 = vunpack.c.0.s8 %v1617
        %v1619 = vlaneseq
        %v1620 = vshrl.u32 %v1619, 7
        %v1621 = vsub.s32 %v1618, %v1620
        %v1622 = vrot.slane %v1608, %v1621
        %v1623 = vcombine.high %v1615, %v1615
        %v1624 = vcombine.high %v1622, %v1622
        %v1626 = vunpack.c.l.s4 1966171168
        %v1627 = vunpack.c.0.s8 %v1626
        %v1628 = vlaneseq
        %v1629 = vshrl.u32 %v1628, 7
        %v1630 = vsub.s32 %v1627, %v1629
        %v1631 = vrot.slane %v1615, %v1630
        %v1633 = vunpack.c.l.s4 1966171168
        %v1634 = vunpack.c.0.s8 %v1633
        %v1635 = vlaneseq
        %v1636 = vshrl.u32 %v1635, 7
        %v1637 = vsub.s32 %v1634, %v1636
        %v1638 = vrot.slane %v1622, %v1637
        %v1640 = vunpack.c.l.s4 1966171168
        %v1641 = vunpack.c.0.s8 %v1640
        %v1642 = vlaneseq
        %v1643 = vshrl.u32 %v1642, 7
        %v1644 = vsub.s32 %v1641, %v1643
        %v1645 = vrot.slane %v1623, %v1644
        %v1647 = vunpack.c.l.s4 1966171168
        %v1648 = vunpack.c.0.s8 %v1647
        %v1649 = vlaneseq
        %v1650 = vshrl.u32 %v1649, 7
        %v1651 = vsub.s32 %v1648, %v1650
        %v1652 = vrot.slane %v1624, %v1651
        %v1653 = vcombine.high %v1631, %v1631
        %v1654 = vcombine.high %v1638, %v1638
        %v1655 = vcombine.high %v1645, %v1645
        %v1656 = vcombine.high %v1652, %v1652
        %v1657 = vlaneseq
        %v1658 = vshrl.u32 %v1657, 7
        %v1659 = vsub.s32 0, %v1658
        %v1660 = vrot.slane %v1631, %v1659
        %v1661 = vlaneseq
        %v1662 = vshrl.u32 %v1661, 7
        %v1663 = vsub.s32 0, %v1662
        %v1664 = vrot.slane %v1645, %v1663
        %v1665 = vlaneseq
        %v1666 = vshrl.u32 %v1665, 7
        %v1667 = vsub.s32 0, %v1666
        %v1668 = vrot.slane %v1653, %v1667
        %v1669 = vlaneseq
        %v1670 = vshrl.u32 %v1669, 7
        %v1671 = vsub.s32 0, %v1670
        %v1672 = vrot.slane %v1655, %v1671
        %v1673 = vlaneseq
        %v1674 = vshrl.u32 %v1673, 7
        %v1675 = vsub.s32 0, %v1674
        %v1676 = vrot.slane %v1638, %v1675
        %v1677 = vlaneseq
        %v1678 = vshrl.u32 %v1677, 7
        %v1679 = vsub.s32 0, %v1678
        %v1680 = vrot.slane %v1652, %v1679
        %v1681 = vlaneseq
        %v1682 = vshrl.u32 %v1681, 7
        %v1683 = vsub.s32 0, %v1682
        %v1684 = vrot.slane %v1654, %v1683
        %v1685 = vlaneseq
        %v1686 = vshrl.u32 %v1685, 7
        %v1687 = vsub.s32 0, %v1686
        %v1688 = vrot.slane %v1656, %v1687
        %v1697 = vmul.f32 %v1660, %v574
        %v1698 = vmul.f32 %v1664, %v575
        %v1699 = vmul.f32 %v1668, %v576
        %v1700 = vmul.f32 %v1672, %v577
        %v1701 = vmul.f32 %v1676, %v578
        %v1702 = vmul.f32 %v1680, %v579
        %v1703 = vmul.f32 %v1684, %v580
        %v1704 = vmul.f32 %v1688, %v581
        %v1705 = vsel %vm594, %v1697, 0.0
        %1706 = vadd.xlane.f32.xlu0 %v1705
        %v1707 = vpop.xlane.xlu0 %1706
        %v1708 = vsel %vm594, %v1698, 0.0
        %1709 = vadd.xlane.f32.xlu0 %v1708
        %v1710 = vpop.xlane.xlu0 %1709
        %v1711 = vsel %vm594, %v1699, 0.0
        %1712 = vadd.xlane.f32.xlu0 %v1711
        %v1713 = vpop.xlane.xlu0 %1712
        %v1714 = vsel %vm594, %v1700, 0.0
        %1715 = vadd.xlane.f32.xlu0 %v1714
        %v1716 = vpop.xlane.xlu0 %1715
        %v1717 = vsel %vm594, %v1701, 0.0
        %1718 = vadd.xlane.f32.xlu0 %v1717
        %v1719 = vpop.xlane.xlu0 %1718
        %v1720 = vsel %vm594, %v1702, 0.0
        %1721 = vadd.xlane.f32.xlu0 %v1720
        %v1722 = vpop.xlane.xlu0 %1721
        %v1723 = vsel %vm594, %v1703, 0.0
        %1724 = vadd.xlane.f32.xlu0 %v1723
        %v1725 = vpop.xlane.xlu0 %1724
        %v1726 = vsel %vm594, %v1704, 0.0
        %1727 = vadd.xlane.f32.xlu0 %v1726
        %v1728 = vpop.xlane.xlu0 %1727
        %v1737 = vlaneseq
        %v1738 = vand.u32 %v1737, 127
        %v1739 = vlaneseq
        %v1740 = vshrl.u32 %v1739, 7
        %v1741 = vsub.s32 %v1738, %v1740
        %v1742 = vrot.slane %v1707, %v1741
        %v1743 = vlaneseq
        %v1744 = vshrl.u32 %v1743, 7
        %v1745 = vsub.s32 %v1738, %v1744
        %v1746 = vrot.slane %v1710, %v1745
        %v1747 = vlaneseq
        %v1748 = vshrl.u32 %v1747, 7
        %v1749 = vsub.s32 %v1738, %v1748
        %v1750 = vrot.slane %v1713, %v1749
        %v1751 = vlaneseq
        %v1752 = vshrl.u32 %v1751, 7
        %v1753 = vsub.s32 %v1738, %v1752
        %v1754 = vrot.slane %v1716, %v1753
        %v1755 = vlaneseq
        %v1756 = vshrl.u32 %v1755, 7
        %v1757 = vsub.s32 %v1738, %v1756
        %v1758 = vrot.slane %v1719, %v1757
        %v1759 = vlaneseq
        %v1760 = vshrl.u32 %v1759, 7
        %v1761 = vsub.s32 %v1738, %v1760
        %v1762 = vrot.slane %v1722, %v1761
        %v1763 = vlaneseq
        %v1764 = vshrl.u32 %v1763, 7
        %v1765 = vsub.s32 %v1738, %v1764
        %v1766 = vrot.slane %v1725, %v1765
        %v1767 = vlaneseq
        %v1768 = vshrl.u32 %v1767, 7
        %v1769 = vsub.s32 %v1738, %v1768
        %v1770 = vrot.slane %v1728, %v1769
        %v1771 = vsel %vm1521, %v1746, %v1742
        %v1772 = vsel %vm1523, %v1750, %v1771
        %v1773 = vsel %vm1525, %v1754, %v1772
        %v1774 = vsel %vm1527, %v1758, %v1773
        %v1775 = vsel %vm1529, %v1762, %v1774
        %v1776 = vsel %vm1531, %v1766, %v1775
        %v1777 = vsel %vm1533, %v1770, %v1776
        %1779 = vxpose.xlu0.b32.start [1/16] %v1777, 128
        %1780 = vxpose.xlu0.b32.cont [2/16] 0.0, 128
        %1781 = vxpose.xlu0.b32.cont [3/16] 0.0, 128
        %1782 = vxpose.xlu0.b32.cont [4/16] 0.0, 128
        %1783 = vxpose.xlu0.b32.cont [5/16] 0.0, 128
        %1784 = vxpose.xlu0.b32.cont [6/16] 0.0, 128
        %1785 = vxpose.xlu0.b32.cont [7/16] 0.0, 128
        %1786 = vxpose.xlu0.b32.cont [8/16] 0.0, 128
        %1787 = vxpose.xlu0.b32.cont [9/16] 0.0, 128
        %1788 = vxpose.xlu0.b32.cont [10/16] 0.0, 128
        %1789 = vxpose.xlu0.b32.cont [11/16] 0.0, 128
        %1790 = vxpose.xlu0.b32.cont [12/16] 0.0, 128
        %1791 = vxpose.xlu0.b32.cont [13/16] 0.0, 128
        %1792 = vxpose.xlu0.b32.cont [14/16] 0.0, 128
        %1793 = vxpose.xlu0.b32.cont [15/16] 0.0, 128
        %1794 = vxpose.xlu0.b32.end [16/16] 0.0, 128
        %v1795 = vpop.trf.xlu0
        %v1796 = vpop.trf.xlu0
        %v1797 = vpop.trf.xlu0
        %v1798 = vpop.trf.xlu0
        %v1799 = vpop.trf.xlu0
        %v1800 = vpop.trf.xlu0
        %v1801 = vpop.trf.xlu0
        %v1802 = vpop.trf.xlu0
        %v1803 = vpop.trf.xlu0
        %v1804 = vpop.trf.xlu0
        %v1805 = vpop.trf.xlu0
        %v1806 = vpop.trf.xlu0
        %v1807 = vpop.trf.xlu0
        %v1808 = vpop.trf.xlu0
        %v1809 = vpop.trf.xlu0
        %v1810 = vpop.trf.xlu0
        %1811 = vst.msk [vmem:[%s565] sm:$0xff] %vm1155, %v1795
        %1812 = vst.msk [vmem:[%s572] sm:$0xff] %vm594, %v1604
        %s1813 = sand.u32 %s309, 1
        %s1814 = scalar_lea.sflag [#allocation4], %s1813
        %s1815 = sand.u32 %s309, 1
        %s1816 = smul.addr %s1815, 8
        %s1817 = scalar_lea.vmem [#allocation14], %s1816
        %s1818 = sand.u32 %s335, 1
        %s1819 = scalar_lea.sflag [#allocation16], %s1818
        %s1820 = sand.u32 %s335, 1
        %s1821 = smul.addr %s1820, 8
        %s1822 = scalar_lea.vmem [#allocation15], %s1821
        // Predicated region
        $region97: #{tpu_custom_call.1} parent=67 // pred_check
          %p1823 = pneg %p319
        $region98: #{tpu_custom_call.1} parent=67 // pred_check_branch
          %1825 = sbr.rel (%p1823) target = $region100
        $region99: #{tpu_custom_call.1} parent=67 // pred_region
          %s1827 = ssub.s32 128, 128
          %1828 = vsyncadd %s1814, %s1827
          %s1829 = smul.addr %s39, 128
          %s1830 = scalar_lea.hbm %s12, %s1829
          %s1832 = sshll.u32 %s1817, 4
          %s1833 = int_to_ptr.vmem [resolvable:$true] %s1832
          %1835 = dma.vmem_to_hbm [thread:$0]  %s1833, 128, %s1830, %s1814
        $region100: #{tpu_custom_call.1} parent=67 // pred_fallthru
          _
        // Predicated region
        $region101: #{tpu_custom_call.1} parent=67 // pred_check
          %p1836 = pneg %p345
        $region102: #{tpu_custom_call.1} parent=67 // pred_check_branch
          %1838 = sbr.rel (%p1836) target = $region104
        $region103: #{tpu_custom_call.1} parent=67 // pred_region
          %s1840 = ssub.s32 128, 128
          %1841 = vsyncadd %s1819, %s1840
          %s1842 = smul.addr %s39, 128
          %s1843 = scalar_lea.hbm %s13, %s1842
          %s1845 = sshll.u32 %s1822, 4
          %s1846 = int_to_ptr.vmem [resolvable:$true] %s1845
          %1848 = dma.vmem_to_hbm [thread:$0]  %s1846, 128, %s1843, %s1819
        $region104: #{tpu_custom_call.1} parent=67 // pred_fallthru
          _
      $region68: #{tpu_custom_call.1} parent=5 // pred_fallthru
        _
      %p1849 = scmp.le.s32.totalorder 2, %s34
      // Predicated region
      $region105: #{tpu_custom_call.1} parent=5 // pred_check
        %p1850 = pneg %p1849
      $region106: #{tpu_custom_call.1} parent=5 // pred_check_branch
        %1852 = sbr.rel (%p1850) target = $region108
      $region107: #{tpu_custom_call.1} parent=5 // pred_region
        %s1853 = ssub.s32 %s34, 2
        // Predicated region
        $region109: #{tpu_custom_call.1} parent=107 // pred_check
          %p1854 = pneg %p325
        $region110: #{tpu_custom_call.1} parent=107 // pred_check_branch
          %1856 = sbr.rel (%p1854) target = $region112
        $region111: #{tpu_custom_call.1} parent=107 // pred_region
          %s1857 = sand.u32 %s310, 1
          %s1858 = scalar_lea.sflag [#allocation4], %s1857
          %s1859 = sand.u32 %s310, 1
          %s1860 = smul.addr %s1859, 8
          %s1861 = scalar_lea.vmem [#allocation14], %s1860
          %1862 = dma.done %s1858, 128
        $region112: #{tpu_custom_call.1} parent=107 // pred_fallthru
          _
        // Predicated region
        $region113: #{tpu_custom_call.1} parent=107 // pred_check
          %p1863 = pneg %p351
        $region114: #{tpu_custom_call.1} parent=107 // pred_check_branch
          %1865 = sbr.rel (%p1863) target = $region116
        $region115: #{tpu_custom_call.1} parent=107 // pred_region
          %s1866 = sand.u32 %s336, 1
          %s1867 = scalar_lea.sflag [#allocation16], %s1866
          %s1868 = sand.u32 %s336, 1
          %s1869 = smul.addr %s1868, 8
          %s1870 = scalar_lea.vmem [#allocation15], %s1869
          %1871 = dma.done %s1867, 128
        $region116: #{tpu_custom_call.1} parent=107 // pred_fallthru
          _
      $region108: #{tpu_custom_call.1} parent=5 // pred_fallthru
        _
    $region6: #{tpu_custom_call.1} parent=1 // loop_footer
      %s38 = sadd.s32 1, %s34
    $region7: #{tpu_custom_call.1} parent=1 // loop_footer_branch
      %33 = sbr.rel target = $region3
    $region8: #{tpu_custom_call.1} parent=1 // loop_exit
      _
    %1872 = vsyncpa [#allocation3], 1
    %s1873 = scalar_lea.sflag [#allocation3], 1
    %1874 = vsyncpa %s1873, 1
    %1875 = vsyncpa [#allocation6], 1
    %s1876 = scalar_lea.sflag [#allocation6], 1
    %1877 = vsyncpa %s1876, 1
    %1878 = vsyncpa [#allocation9], 1
    %1879 = vsyncpa [#allocation12], 1
    %1880 = vsyncpa [#allocation4], 1
    %s1881 = scalar_lea.sflag [#allocation4], 1
    %1882 = vsyncpa %s1881, 1
    %1883 = vsyncpa [#allocation16], 1
    %s1884 = scalar_lea.sflag [#allocation16], 1
    %1885 = vsyncpa %s1884, 1

</llo_original>
